<compile_context>
chip_gen: v6e
topology: v6e:2x2x1
jax: 0.10.0
libtpu: 0.0.40
codegen_flags: <defaults>
</compile_context>

<pallas_src>
import functools

import jax
import jax.numpy as jnp
from jax.experimental import pallas as pl
from jax.experimental.pallas import tpu as pltpu


def _round_up(x, m):
    return ((x + m - 1) // m) * m


# --------------------------------------------------------------------------- #
# Kernel
# --------------------------------------------------------------------------- #
def critic_kernel(sa_ref, emb_ref,
                  w01_ref, b01_ref, w1h_ref, w1e_ref, b1_ref, w2_ref, b2_ref, wf1_ref,
                  w02_ref, b02_ref, w4h_ref, w4e_ref, b4_ref, w5_ref, b5_ref, wf2_ref,
                  bf_ref, out_ref, *, hdim, eps=1e-8):
    sa = sa_ref[...]     # [TB, SA_P]  bf16
    emb = emb_ref[...]   # [TB, E_P]   bf16

    inv_h = jnp.float32(1.0 / hdim)  # true (unpadded) hdim for AvgL1Norm

    def elu(x):
        return jnp.where(x > 0.0, x, jnp.exp(x) - 1.0)

    def branch(w0, b0, w1h, w1e, b1, w2, b2, wf):
        # q0 + AvgL1Norm (padded lanes of a0 are exactly zero -> sum is exact)
        a0 = jnp.dot(sa, w0[...], preferred_element_type=jnp.float32) + b0[...]
        denom = jnp.maximum(jnp.sum(jnp.abs(a0), axis=-1, keepdims=True) * inv_h, eps)
        a0 = a0 * pl.reciprocal(denom, approx=True)

        # q1 on cat([a0, emb]) == a0 @ W1h + emb @ W1e + b1   (concat fused)
        a1 = (jnp.dot(a0.astype(jnp.bfloat16), w1h[...], preferred_element_type=jnp.float32)
              + jnp.dot(emb, w1e[...], preferred_element_type=jnp.float32)
              + b1[...])
        a1 = elu(a1)

        a2 = jnp.dot(a1.astype(jnp.bfloat16), w2[...], preferred_element_type=jnp.float32) + b2[...]
        a2 = elu(a2)

        # lane-dense final layer: wf is [H_P, 128] with the real column placed
        # at lane 0 (branch 1) or lane 1 (branch 2), zeros elsewhere.
        return jnp.dot(a2.astype(jnp.bfloat16), wf[...], preferred_element_type=jnp.float32)

    q1 = branch(w01_ref, b01_ref, w1h_ref, w1e_ref, b1_ref, w2_ref, b2_ref, wf1_ref)
    q2 = branch(w02_ref, b02_ref, w4h_ref, w4e_ref, b4_ref, w5_ref, b5_ref, wf2_ref)

    out_ref[...] = q1 + q2 + bf_ref[...]   # [TB, 128], lanes 0/1 = q1/q2


# --------------------------------------------------------------------------- #
# One-time parameter preparation (padding / split / bf16 cast) — NOT per call.
# --------------------------------------------------------------------------- #
def prepare_critic_params(p):
    sa_dim, hdim = p["q01_w"].shape
    emb_dim = p["q1_w"].shape[0] - hdim
    SA_P, E_P, H_P, OUT_P = (_round_up(sa_dim, 128), _round_up(emb_dim, 128),
                             _round_up(hdim, 128), 128)

    def pad2(w, r, c):
        return jnp.pad(w, ((0, r - w.shape[0]), (0, c - w.shape[1])))

    def prep_branch(w0, b0, w1, b1, w2, b2, w3, out_col):
        w1h, w1e = w1[:hdim], w1[hdim:]                      # hidden / embeddings split
        wf = jnp.zeros((H_P, OUT_P), jnp.float32).at[:hdim, out_col].set(w3[:, 0])
        return dict(
            w0=pad2(w0, SA_P, H_P).astype(jnp.bfloat16),
            b0=pad2(b0, 1, H_P),
            w1h=pad2(w1h, H_P, H_P).astype(jnp.bfloat16),
            w1e=pad2(w1e, E_P, H_P).astype(jnp.bfloat16),
            b1=pad2(b1, 1, H_P),
            w2=pad2(w2, H_P, H_P).astype(jnp.bfloat16),
            b2=pad2(b2, 1, H_P),
            wf=wf.astype(jnp.bfloat16),
        )

    br1 = prep_branch(p["q01_w"], p["q01_b"], p["q1_w"], p["q1_b"],
                      p["q2_w"], p["q2_b"], p["q3_w"], 0)
    br2 = prep_branch(p["q02_w"], p["q02_b"], p["q4_w"], p["q4_b"],
                      p["q5_w"], p["q5_b"], p["q6_w"], 1)
    bf = (jnp.zeros((1, OUT_P), jnp.float32)
          .at[0, 0].set(p["q3_b"][0, 0])
          .at[0, 1].set(p["q6_b"][0, 0]))

    dims = dict(sa_dim=sa_dim, emb_dim=emb_dim, hdim=hdim,
                SA_P=SA_P, E_P=E_P, H_P=H_P, OUT_P=OUT_P)
    return dict(br1=br1, br2=br2, bf=bf, dims=dims)


# --------------------------------------------------------------------------- #
# Wrapper
# --------------------------------------------------------------------------- #
def critic_forward(state, action, zsa, zs, prepared, *, tb_max=256):
    d = prepared["dims"]
    SA_P, E_P, H_P, OUT_P = d["SA_P"], d["E_P"], d["H_P"], d["OUT_P"]
    sa_dim, emb_dim, hdim = d["sa_dim"], d["emb_dim"], d["hdim"]
    B = state.shape[0]

    sa = jnp.concatenate([state, action], axis=1)
    emb = jnp.concatenate([zsa, zs], axis=1)

    TB = min(_round_up(B, 8), tb_max)          # multiple of 8 sublanes, <= 256 rows
    B_P = _round_up(B, TB)

    sa_p = jnp.pad(sa, ((0, B_P - B), (0, SA_P - sa.shape[1]))).astype(jnp.bfloat16)
    emb_p = jnp.pad(emb, ((0, B_P - B), (0, E_P - emb.shape[1]))).astype(jnp.bfloat16)

    br1, br2, bf = prepared["br1"], prepared["br2"], prepared["bf"]
    weight_args = (br1["w0"], br1["b0"], br1["w1h"], br1["w1e"], br1["b1"],
                   br1["w2"], br1["b2"], br1["wf"],
                   br2["w0"], br2["b0"], br2["w1h"], br2["w1e"], br2["b1"],
                   br2["w2"], br2["b2"], br2["wf"],
                   bf)

    def batch_spec(cols):
        return pl.BlockSpec((TB, cols), lambda i: (i, 0))

    def weight_spec(w):
        # constant index_map -> weight stays VMEM-resident across grid steps
        return pl.BlockSpec(w.shape, lambda i: (0, 0))

    in_specs = [batch_spec(SA_P), batch_spec(E_P)] + [weight_spec(w) for w in weight_args]

    # Advisory cost estimate from true (unpadded) dims.
    flops = 2 * B * 2 * (sa_dim * hdim + (hdim + emb_dim) * hdim + hdim * hdim + hdim)
    transcendentals = 2 * B * (2 * hdim + 1)
    bytes_accessed = int(sa_p.size * 2 + emb_p.size * 2
                         + sum(int(w.size) * w.dtype.itemsize for w in weight_args)
                         + B_P * OUT_P * 4)

    kernel = functools.partial(critic_kernel, hdim=hdim)

    out = pl.pallas_call(
        kernel,
        out_shape=jax.ShapeDtypeStruct((B_P, OUT_P), jnp.float32),
        grid=(B_P // TB,),
        in_specs=in_specs,
        out_specs=pl.BlockSpec((TB, OUT_P), lambda i: (i, 0)),
        compiler_params=pltpu.CompilerParams(
            dimension_semantics=("parallel",),
            vmem_limit_bytes=32 * 1024 * 1024),
        cost_estimate=pl.CostEstimate(flops=flops,
                                      transcendentals=transcendentals,
                                      bytes_accessed=bytes_accessed),
    )(sa_p, emb_p, *weight_args)

    return out[:B, :2]


# --------------------------------------------------------------------------- #
# Init + plain-JAX reference
# --------------------------------------------------------------------------- #
def init_critic_params(key, state_dim, action_dim, zs_dim, hdim):
    """PyTorch-style uniform(-1/sqrt(fan_in), 1/sqrt(fan_in)); weights [in, out]."""
    def linear(k, fan_in, fan_out):
        kw, kb = jax.random.split(k)
        bound = 1.0 / jnp.sqrt(fan_in)
        w = jax.random.uniform(kw, (fan_in, fan_out), jnp.float32, -bound, bound)
        b = jax.random.uniform(kb, (1, fan_out), jnp.float32, -bound, bound)
        return w, b

    ks = jax.random.split(key, 8)
    sa_dim, cat_dim = state_dim + action_dim, 2 * zs_dim + hdim
    p = {}
    p["q01_w"], p["q01_b"] = linear(ks[0], sa_dim, hdim)
    p["q1_w"], p["q1_b"] = linear(ks[1], cat_dim, hdim)
    p["q2_w"], p["q2_b"] = linear(ks[2], hdim, hdim)
    p["q3_w"], p["q3_b"] = linear(ks[3], hdim, 1)
    p["q02_w"], p["q02_b"] = linear(ks[4], sa_dim, hdim)
    p["q4_w"], p["q4_b"] = linear(ks[5], cat_dim, hdim)
    p["q5_w"], p["q5_b"] = linear(ks[6], hdim, hdim)
    p["q6_w"], p["q6_b"] = linear(ks[7], hdim, 1)
    return p


def critic_reference(state, action, zsa, zs, p):
    sa = jnp.concatenate([state, action], axis=1)
    emb = jnp.concatenate([zsa, zs], axis=1)

    def branch(w0, b0, w1, b1, w2, b2, w3, b3):
        q = sa @ w0 + b0
        q = q / jnp.maximum(jnp.mean(jnp.abs(q), axis=-1, keepdims=True), 1e-8)
        q = jnp.concatenate([q, emb], axis=1)
        q = jax.nn.elu(q @ w1 + b1)
        q = jax.nn.elu(q @ w2 + b2)
        return q @ w3 + b3

    q1 = branch(p["q01_w"], p["q01_b"], p["q1_w"], p["q1_b"],
                p["q2_w"], p["q2_b"], p["q3_w"], p["q3_b"])
    q2 = branch(p["q02_w"], p["q02_b"], p["q4_w"], p["q4_b"],
                p["q5_w"], p["q5_b"], p["q6_w"], p["q6_b"])
    return jnp.concatenate([q1, q2], axis=1)


# --------------------------------------------------------------------------- #
if __name__ == "__main__":
    # Small shapes consistent with Critic(state_dim, action_dim, zs_dim, hdim)
    B, state_dim, action_dim, zs_dim, hdim = 2, 10, 4, 16, 32

    key = jax.random.PRNGKey(0)
    kp, ks, ka, kzsa, kzs = jax.random.split(key, 5)

    params = init_critic_params(kp, state_dim, action_dim, zs_dim, hdim)
    prepared = prepare_critic_params(params)   # padding / split / bf16 cast done once

    state = jax.random.normal(ks, (B, state_dim), jnp.float32)
    action = jax.random.normal(ka, (B, action_dim), jnp.float32)
    zsa = jax.random.normal(kzsa, (B, zs_dim), jnp.float32)
    zs = jax.random.normal(kzs, (B, zs_dim), jnp.float32)

    out = jax.block_until_ready(critic_forward(state, action, zsa, zs, prepared))
    ref = jax.block_until_ready(critic_reference(state, action, zsa, zs, params))

    assert out.shape == (B, 2)
    # bf16 MXU inputs (f32 accumulation) + approx reciprocal -> relaxed tolerance
    assert jnp.allclose(out, ref, atol=5e-2, rtol=5e-2), "mismatch vs reference"

    print("KERNEL_OK")
</pallas_src>

<mosaic_0001>
module attributes {stable_mosaic.version = 11 : i64} {
  func.func @critic_kernel(%arg0: i32, %arg1: memref<8x128xbf16, #tpu.memory_space<vmem>>, %arg2: memref<8x128xbf16, #tpu.memory_space<vmem>>, %arg3: memref<128x128xbf16, #tpu.memory_space<vmem>>, %arg4: memref<1x128xf32, #tpu.memory_space<vmem>>, %arg5: memref<128x128xbf16, #tpu.memory_space<vmem>>, %arg6: memref<128x128xbf16, #tpu.memory_space<vmem>>, %arg7: memref<1x128xf32, #tpu.memory_space<vmem>>, %arg8: memref<128x128xbf16, #tpu.memory_space<vmem>>, %arg9: memref<1x128xf32, #tpu.memory_space<vmem>>, %arg10: memref<128x128xbf16, #tpu.memory_space<vmem>>, %arg11: memref<128x128xbf16, #tpu.memory_space<vmem>>, %arg12: memref<1x128xf32, #tpu.memory_space<vmem>>, %arg13: memref<128x128xbf16, #tpu.memory_space<vmem>>, %arg14: memref<128x128xbf16, #tpu.memory_space<vmem>>, %arg15: memref<1x128xf32, #tpu.memory_space<vmem>>, %arg16: memref<128x128xbf16, #tpu.memory_space<vmem>>, %arg17: memref<1x128xf32, #tpu.memory_space<vmem>>, %arg18: memref<128x128xbf16, #tpu.memory_space<vmem>>, %arg19: memref<1x128xf32, #tpu.memory_space<vmem>>, %arg20: memref<8x128xf32, #tpu.memory_space<vmem>>) attributes {dimension_semantics = [#tpu.dimension_semantics<parallel>], iteration_bounds = array<i64: 1>, scalar_prefetch = 0 : i64, scratch_operands = 0 : i64, tpu.core_type = #tpu.core_type<tc>, window_params = [{transform_indices = @transform_0, window_bounds = array<i64: 8, 128>}, {transform_indices = @transform_1, window_bounds = array<i64: 8, 128>}, {pipeline_mode = #tpu.pipeline_mode<synchronous>, transform_indices = @transform_2, window_bounds = array<i64: 128, 128>}, {pipeline_mode = #tpu.pipeline_mode<synchronous>, transform_indices = @transform_3, window_bounds = array<i64: 1, 128>}, {pipeline_mode = #tpu.pipeline_mode<synchronous>, transform_indices = @transform_4, window_bounds = array<i64: 128, 128>}, {pipeline_mode = #tpu.pipeline_mode<synchronous>, transform_indices = @transform_5, window_bounds = array<i64: 128, 128>}, {pipeline_mode = #tpu.pipeline_mode<synchronous>, transform_indices = @transform_6, window_bounds = array<i64: 1, 128>}, {pipeline_mode = #tpu.pipeline_mode<synchronous>, transform_indices = @transform_7, window_bounds = array<i64: 128, 128>}, {pipeline_mode = #tpu.pipeline_mode<synchronous>, transform_indices = @transform_8, window_bounds = array<i64: 1, 128>}, {pipeline_mode = #tpu.pipeline_mode<synchronous>, transform_indices = @transform_9, window_bounds = array<i64: 128, 128>}, {pipeline_mode = #tpu.pipeline_mode<synchronous>, transform_indices = @transform_10, window_bounds = array<i64: 128, 128>}, {pipeline_mode = #tpu.pipeline_mode<synchronous>, transform_indices = @transform_11, window_bounds = array<i64: 1, 128>}, {pipeline_mode = #tpu.pipeline_mode<synchronous>, transform_indices = @transform_12, window_bounds = array<i64: 128, 128>}, {pipeline_mode = #tpu.pipeline_mode<synchronous>, transform_indices = @transform_13, window_bounds = array<i64: 128, 128>}, {pipeline_mode = #tpu.pipeline_mode<synchronous>, transform_indices = @transform_14, window_bounds = array<i64: 1, 128>}, {pipeline_mode = #tpu.pipeline_mode<synchronous>, transform_indices = @transform_15, window_bounds = array<i64: 128, 128>}, {pipeline_mode = #tpu.pipeline_mode<synchronous>, transform_indices = @transform_16, window_bounds = array<i64: 1, 128>}, {pipeline_mode = #tpu.pipeline_mode<synchronous>, transform_indices = @transform_17, window_bounds = array<i64: 128, 128>}, {pipeline_mode = #tpu.pipeline_mode<synchronous>, transform_indices = @transform_18, window_bounds = array<i64: 1, 128>}, {transform_indices = @transform_19, window_bounds = array<i64: 8, 128>}]} {
    %c0 = arith.constant 0 : index
    %c0_0 = arith.constant 0 : index
    %0 = vector.load %arg1[%c0, %c0_0] : memref<8x128xbf16, #tpu.memory_space<vmem>>, vector<8x128xbf16>
    %c0_1 = arith.constant 0 : index
    %c0_2 = arith.constant 0 : index
    %1 = vector.load %arg2[%c0_1, %c0_2] : memref<8x128xbf16, #tpu.memory_space<vmem>>, vector<8x128xbf16>
    %c0_3 = arith.constant 0 : index
    %c0_4 = arith.constant 0 : index
    %2 = vector.load %arg3[%c0_3, %c0_4] : memref<128x128xbf16, #tpu.memory_space<vmem>>, vector<128x128xbf16>
    %cst = arith.constant dense<0.000000e+00> : vector<8x128xf32>
    %3 = tpu.matmul %0, %2, %cst {dimension_numbers = #tpu.dot_dimension_numbers<[1], [0], [0], [1], [0, 0, 1, 1], [], []>} : vector<8x128xbf16>, vector<128x128xbf16>, vector<8x128xf32> -> vector<8x128xf32>
    %c0_5 = arith.constant 0 : index
    %c0_6 = arith.constant 0 : index
    %4 = vector.load %arg4[%c0_5, %c0_6] : memref<1x128xf32, #tpu.memory_space<vmem>>, vector<1x128xf32>
    %5 = vector.broadcast %4 : vector<1x128xf32> to vector<8x128xf32>
    %6 = arith.addf %3, %5 : vector<8x128xf32>
    %7 = math.absf %6 : vector<8x128xf32>
    %cst_7 = arith.constant dense<0.000000e+00> : vector<8xf32>
    %8 = vector.multi_reduction <add>, %7, %cst_7 [1] : vector<8x128xf32> to vector<8xf32>
    %9 = vector.shape_cast %8 : vector<8xf32> to vector<8x1xf32>
    %cst_8 = arith.constant 3.125000e-02 : f32
    %10 = vector.broadcast %cst_8 : f32 to vector<8x1xf32>
    %11 = arith.mulf %9, %10 : vector<8x1xf32>
    %cst_9 = arith.constant 9.99999993E-9 : f32
    %12 = vector.broadcast %cst_9 : f32 to vector<8x1xf32>
    %13 = arith.maximumf %11, %12 : vector<8x1xf32>
    %14 = tpu.reciprocal %13 {approx = true} : vector<8x1xf32> -> vector<8x1xf32>
    %15 = vector.broadcast %14 : vector<8x1xf32> to vector<8x128xf32>
    %16 = arith.mulf %6, %15 : vector<8x128xf32>
    %17 = arith.truncf %16 : vector<8x128xf32> to vector<8x128xbf16>
    %c0_10 = arith.constant 0 : index
    %c0_11 = arith.constant 0 : index
    %18 = vector.load %arg5[%c0_10, %c0_11] : memref<128x128xbf16, #tpu.memory_space<vmem>>, vector<128x128xbf16>
    %cst_12 = arith.constant dense<0.000000e+00> : vector<8x128xf32>
    %19 = tpu.matmul %17, %18, %cst_12 {dimension_numbers = #tpu.dot_dimension_numbers<[1], [0], [0], [1], [0, 0, 1, 1], [], []>} : vector<8x128xbf16>, vector<128x128xbf16>, vector<8x128xf32> -> vector<8x128xf32>
    %c0_13 = arith.constant 0 : index
    %c0_14 = arith.constant 0 : index
    %20 = vector.load %arg6[%c0_13, %c0_14] : memref<128x128xbf16, #tpu.memory_space<vmem>>, vector<128x128xbf16>
    %cst_15 = arith.constant dense<0.000000e+00> : vector<8x128xf32>
    %21 = tpu.matmul %1, %20, %cst_15 {dimension_numbers = #tpu.dot_dimension_numbers<[1], [0], [0], [1], [0, 0, 1, 1], [], []>} : vector<8x128xbf16>, vector<128x128xbf16>, vector<8x128xf32> -> vector<8x128xf32>
    %22 = arith.addf %19, %21 : vector<8x128xf32>
    %c0_16 = arith.constant 0 : index
    %c0_17 = arith.constant 0 : index
    %23 = vector.load %arg7[%c0_16, %c0_17] : memref<1x128xf32, #tpu.memory_space<vmem>>, vector<1x128xf32>
    %24 = vector.broadcast %23 : vector<1x128xf32> to vector<8x128xf32>
    %25 = arith.addf %22, %24 : vector<8x128xf32>
    %cst_18 = arith.constant 0.000000e+00 : f32
    %26 = vector.broadcast %cst_18 : f32 to vector<8x128xf32>
    %27 = arith.cmpf ogt, %25, %26 : vector<8x128xf32>
    %28 = math.exp %25 : vector<8x128xf32>
    %cst_19 = arith.constant 1.000000e+00 : f32
    %29 = vector.broadcast %cst_19 : f32 to vector<8x128xf32>
    %30 = arith.subf %28, %29 : vector<8x128xf32>
    %31 = arith.select %27, %25, %30 : vector<8x128xi1>, vector<8x128xf32>
    %32 = arith.truncf %31 : vector<8x128xf32> to vector<8x128xbf16>
    %c0_20 = arith.constant 0 : index
    %c0_21 = arith.constant 0 : index
    %33 = vector.load %arg8[%c0_20, %c0_21] : memref<128x128xbf16, #tpu.memory_space<vmem>>, vector<128x128xbf16>
    %cst_22 = arith.constant dense<0.000000e+00> : vector<8x128xf32>
    %34 = tpu.matmul %32, %33, %cst_22 {dimension_numbers = #tpu.dot_dimension_numbers<[1], [0], [0], [1], [0, 0, 1, 1], [], []>} : vector<8x128xbf16>, vector<128x128xbf16>, vector<8x128xf32> -> vector<8x128xf32>
    %c0_23 = arith.constant 0 : index
    %c0_24 = arith.constant 0 : index
    %35 = vector.load %arg9[%c0_23, %c0_24] : memref<1x128xf32, #tpu.memory_space<vmem>>, vector<1x128xf32>
    %36 = vector.broadcast %35 : vector<1x128xf32> to vector<8x128xf32>
    %37 = arith.addf %34, %36 : vector<8x128xf32>
    %cst_25 = arith.constant 0.000000e+00 : f32
    %38 = vector.broadcast %cst_25 : f32 to vector<8x128xf32>
    %39 = arith.cmpf ogt, %37, %38 : vector<8x128xf32>
    %40 = math.exp %37 : vector<8x128xf32>
    %cst_26 = arith.constant 1.000000e+00 : f32
    %41 = vector.broadcast %cst_26 : f32 to vector<8x128xf32>
    %42 = arith.subf %40, %41 : vector<8x128xf32>
    %43 = arith.select %39, %37, %42 : vector<8x128xi1>, vector<8x128xf32>
    %44 = arith.truncf %43 : vector<8x128xf32> to vector<8x128xbf16>
    %c0_27 = arith.constant 0 : index
    %c0_28 = arith.constant 0 : index
    %45 = vector.load %arg10[%c0_27, %c0_28] : memref<128x128xbf16, #tpu.memory_space<vmem>>, vector<128x128xbf16>
    %cst_29 = arith.constant dense<0.000000e+00> : vector<8x128xf32>
    %46 = tpu.matmul %44, %45, %cst_29 {dimension_numbers = #tpu.dot_dimension_numbers<[1], [0], [0], [1], [0, 0, 1, 1], [], []>} : vector<8x128xbf16>, vector<128x128xbf16>, vector<8x128xf32> -> vector<8x128xf32>
    %c0_30 = arith.constant 0 : index
    %c0_31 = arith.constant 0 : index
    %47 = vector.load %arg11[%c0_30, %c0_31] : memref<128x128xbf16, #tpu.memory_space<vmem>>, vector<128x128xbf16>
    %cst_32 = arith.constant dense<0.000000e+00> : vector<8x128xf32>
    %48 = tpu.matmul %0, %47, %cst_32 {dimension_numbers = #tpu.dot_dimension_numbers<[1], [0], [0], [1], [0, 0, 1, 1], [], []>} : vector<8x128xbf16>, vector<128x128xbf16>, vector<8x128xf32> -> vector<8x128xf32>
    %c0_33 = arith.constant 0 : index
    %c0_34 = arith.constant 0 : index
    %49 = vector.load %arg12[%c0_33, %c0_34] : memref<1x128xf32, #tpu.memory_space<vmem>>, vector<1x128xf32>
    %50 = vector.broadcast %49 : vector<1x128xf32> to vector<8x128xf32>
    %51 = arith.addf %48, %50 : vector<8x128xf32>
    %52 = math.absf %51 : vector<8x128xf32>
    %cst_35 = arith.constant dense<0.000000e+00> : vector<8xf32>
    %53 = vector.multi_reduction <add>, %52, %cst_35 [1] : vector<8x128xf32> to vector<8xf32>
    %54 = vector.shape_cast %53 : vector<8xf32> to vector<8x1xf32>
    %cst_36 = arith.constant 3.125000e-02 : f32
    %55 = vector.broadcast %cst_36 : f32 to vector<8x1xf32>
    %56 = arith.mulf %54, %55 : vector<8x1xf32>
    %cst_37 = arith.constant 9.99999993E-9 : f32
    %57 = vector.broadcast %cst_37 : f32 to vector<8x1xf32>
    %58 = arith.maximumf %56, %57 : vector<8x1xf32>
    %59 = tpu.reciprocal %58 {approx = true} : vector<8x1xf32> -> vector<8x1xf32>
    %60 = vector.broadcast %59 : vector<8x1xf32> to vector<8x128xf32>
    %61 = arith.mulf %51, %60 : vector<8x128xf32>
    %62 = arith.truncf %61 : vector<8x128xf32> to vector<8x128xbf16>
    %c0_38 = arith.constant 0 : index
    %c0_39 = arith.constant 0 : index
    %63 = vector.load %arg13[%c0_38, %c0_39] : memref<128x128xbf16, #tpu.memory_space<vmem>>, vector<128x128xbf16>
    %cst_40 = arith.constant dense<0.000000e+00> : vector<8x128xf32>
    %64 = tpu.matmul %62, %63, %cst_40 {dimension_numbers = #tpu.dot_dimension_numbers<[1], [0], [0], [1], [0, 0, 1, 1], [], []>} : vector<8x128xbf16>, vector<128x128xbf16>, vector<8x128xf32> -> vector<8x128xf32>
    %c0_41 = arith.constant 0 : index
    %c0_42 = arith.constant 0 : index
    %65 = vector.load %arg14[%c0_41, %c0_42] : memref<128x128xbf16, #tpu.memory_space<vmem>>, vector<128x128xbf16>
    %cst_43 = arith.constant dense<0.000000e+00> : vector<8x128xf32>
    %66 = tpu.matmul %1, %65, %cst_43 {dimension_numbers = #tpu.dot_dimension_numbers<[1], [0], [0], [1], [0, 0, 1, 1], [], []>} : vector<8x128xbf16>, vector<128x128xbf16>, vector<8x128xf32> -> vector<8x128xf32>
    %67 = arith.addf %64, %66 : vector<8x128xf32>
    %c0_44 = arith.constant 0 : index
    %c0_45 = arith.constant 0 : index
    %68 = vector.load %arg15[%c0_44, %c0_45] : memref<1x128xf32, #tpu.memory_space<vmem>>, vector<1x128xf32>
    %69 = vector.broadcast %68 : vector<1x128xf32> to vector<8x128xf32>
    %70 = arith.addf %67, %69 : vector<8x128xf32>
    %cst_46 = arith.constant 0.000000e+00 : f32
    %71 = vector.broadcast %cst_46 : f32 to vector<8x128xf32>
    %72 = arith.cmpf ogt, %70, %71 : vector<8x128xf32>
    %73 = math.exp %70 : vector<8x128xf32>
    %cst_47 = arith.constant 1.000000e+00 : f32
    %74 = vector.broadcast %cst_47 : f32 to vector<8x128xf32>
    %75 = arith.subf %73, %74 : vector<8x128xf32>
    %76 = arith.select %72, %70, %75 : vector<8x128xi1>, vector<8x128xf32>
    %77 = arith.truncf %76 : vector<8x128xf32> to vector<8x128xbf16>
    %c0_48 = arith.constant 0 : index
    %c0_49 = arith.constant 0 : index
    %78 = vector.load %arg16[%c0_48, %c0_49] : memref<128x128xbf16, #tpu.memory_space<vmem>>, vector<128x128xbf16>
    %cst_50 = arith.constant dense<0.000000e+00> : vector<8x128xf32>
    %79 = tpu.matmul %77, %78, %cst_50 {dimension_numbers = #tpu.dot_dimension_numbers<[1], [0], [0], [1], [0, 0, 1, 1], [], []>} : vector<8x128xbf16>, vector<128x128xbf16>, vector<8x128xf32> -> vector<8x128xf32>
    %c0_51 = arith.constant 0 : index
    %c0_52 = arith.constant 0 : index
    %80 = vector.load %arg17[%c0_51, %c0_52] : memref<1x128xf32, #tpu.memory_space<vmem>>, vector<1x128xf32>
    %81 = vector.broadcast %80 : vector<1x128xf32> to vector<8x128xf32>
    %82 = arith.addf %79, %81 : vector<8x128xf32>
    %cst_53 = arith.constant 0.000000e+00 : f32
    %83 = vector.broadcast %cst_53 : f32 to vector<8x128xf32>
    %84 = arith.cmpf ogt, %82, %83 : vector<8x128xf32>
    %85 = math.exp %82 : vector<8x128xf32>
    %cst_54 = arith.constant 1.000000e+00 : f32
    %86 = vector.broadcast %cst_54 : f32 to vector<8x128xf32>
    %87 = arith.subf %85, %86 : vector<8x128xf32>
    %88 = arith.select %84, %82, %87 : vector<8x128xi1>, vector<8x128xf32>
    %89 = arith.truncf %88 : vector<8x128xf32> to vector<8x128xbf16>
    %c0_55 = arith.constant 0 : index
    %c0_56 = arith.constant 0 : index
    %90 = vector.load %arg18[%c0_55, %c0_56] : memref<128x128xbf16, #tpu.memory_space<vmem>>, vector<128x128xbf16>
    %cst_57 = arith.constant dense<0.000000e+00> : vector<8x128xf32>
    %91 = tpu.matmul %89, %90, %cst_57 {dimension_numbers = #tpu.dot_dimension_numbers<[1], [0], [0], [1], [0, 0, 1, 1], [], []>} : vector<8x128xbf16>, vector<128x128xbf16>, vector<8x128xf32> -> vector<8x128xf32>
    %92 = arith.addf %46, %91 : vector<8x128xf32>
    %c0_58 = arith.constant 0 : index
    %c0_59 = arith.constant 0 : index
    %93 = vector.load %arg19[%c0_58, %c0_59] : memref<1x128xf32, #tpu.memory_space<vmem>>, vector<1x128xf32>
    %94 = vector.broadcast %93 : vector<1x128xf32> to vector<8x128xf32>
    %95 = arith.addf %92, %94 : vector<8x128xf32>
    %c0_60 = arith.constant 0 : index
    %c0_61 = arith.constant 0 : index
    %96 = vector.load %arg20[%c0_60, %c0_61] : memref<8x128xf32, #tpu.memory_space<vmem>>, vector<8x128xf32>
    tpu.vector_store %arg20[%c0_60, %c0_61], %95 {strides = array<i32>} : memref<8x128xf32, #tpu.memory_space<vmem>>, vector<8x128xf32>,
    return
  }
  func.func @transform_0(%arg0: i32) -> (i32, i32) {
    %c0_i32 = arith.constant 0 : i32
    %c0_i32_0 = arith.constant 0 : i32
    return %arg0, %c0_i32 : i32, i32
  }
  func.func @transform_1(%arg0: i32) -> (i32, i32) {
    %c0_i32 = arith.constant 0 : i32
    %c0_i32_0 = arith.constant 0 : i32
    return %arg0, %c0_i32 : i32, i32
  }
  func.func @transform_2(%arg0: i32) -> (i32, i32) {
    %c0_i32 = arith.constant 0 : i32
    %c0_i32_0 = arith.constant 0 : i32
    %c0_i32_1 = arith.constant 0 : i32
    return %c0_i32, %c0_i32_0 : i32, i32
  }
  func.func @transform_3(%arg0: i32) -> (i32, i32) {
    %c0_i32 = arith.constant 0 : i32
    %c0_i32_0 = arith.constant 0 : i32
    %c0_i32_1 = arith.constant 0 : i32
    return %c0_i32, %c0_i32_0 : i32, i32
  }
  func.func @transform_4(%arg0: i32) -> (i32, i32) {
    %c0_i32 = arith.constant 0 : i32
    %c0_i32_0 = arith.constant 0 : i32
    %c0_i32_1 = arith.constant 0 : i32
    return %c0_i32, %c0_i32_0 : i32, i32
  }
  func.func @transform_5(%arg0: i32) -> (i32, i32) {
    %c0_i32 = arith.constant 0 : i32
    %c0_i32_0 = arith.constant 0 : i32
    %c0_i32_1 = arith.constant 0 : i32
    return %c0_i32, %c0_i32_0 : i32, i32
  }
  func.func @transform_6(%arg0: i32) -> (i32, i32) {
    %c0_i32 = arith.constant 0 : i32
    %c0_i32_0 = arith.constant 0 : i32
    %c0_i32_1 = arith.constant 0 : i32
    return %c0_i32, %c0_i32_0 : i32, i32
  }
  func.func @transform_7(%arg0: i32) -> (i32, i32) {
    %c0_i32 = arith.constant 0 : i32
    %c0_i32_0 = arith.constant 0 : i32
    %c0_i32_1 = arith.constant 0 : i32
    return %c0_i32, %c0_i32_0 : i32, i32
  }
  func.func @transform_8(%arg0: i32) -> (i32, i32) {
    %c0_i32 = arith.constant 0 : i32
    %c0_i32_0 = arith.constant 0 : i32
    %c0_i32_1 = arith.constant 0 : i32
    return %c0_i32, %c0_i32_0 : i32, i32
  }
  func.func @transform_9(%arg0: i32) -> (i32, i32) {
    %c0_i32 = arith.constant 0 : i32
    %c0_i32_0 = arith.constant 0 : i32
    %c0_i32_1 = arith.constant 0 : i32
    return %c0_i32, %c0_i32_0 : i32, i32
  }
  func.func @transform_10(%arg0: i32) -> (i32, i32) {
    %c0_i32 = arith.constant 0 : i32
    %c0_i32_0 = arith.constant 0 : i32
    %c0_i32_1 = arith.constant 0 : i32
    return %c0_i32, %c0_i32_0 : i32, i32
  }
  func.func @transform_11(%arg0: i32) -> (i32, i32) {
    %c0_i32 = arith.constant 0 : i32
    %c0_i32_0 = arith.constant 0 : i32
    %c0_i32_1 = arith.constant 0 : i32
    return %c0_i32, %c0_i32_0 : i32, i32
  }
  func.func @transform_12(%arg0: i32) -> (i32, i32) {
    %c0_i32 = arith.constant 0 : i32
    %c0_i32_0 = arith.constant 0 : i32
    %c0_i32_1 = arith.constant 0 : i32
    return %c0_i32, %c0_i32_0 : i32, i32
  }
  func.func @transform_13(%arg0: i32) -> (i32, i32) {
    %c0_i32 = arith.constant 0 : i32
    %c0_i32_0 = arith.constant 0 : i32
    %c0_i32_1 = arith.constant 0 : i32
    return %c0_i32, %c0_i32_0 : i32, i32
  }
  func.func @transform_14(%arg0: i32) -> (i32, i32) {
    %c0_i32 = arith.constant 0 : i32
    %c0_i32_0 = arith.constant 0 : i32
    %c0_i32_1 = arith.constant 0 : i32
    return %c0_i32, %c0_i32_0 : i32, i32
  }
  func.func @transform_15(%arg0: i32) -> (i32, i32) {
    %c0_i32 = arith.constant 0 : i32
    %c0_i32_0 = arith.constant 0 : i32
    %c0_i32_1 = arith.constant 0 : i32
    return %c0_i32, %c0_i32_0 : i32, i32
  }
  func.func @transform_16(%arg0: i32) -> (i32, i32) {
    %c0_i32 = arith.constant 0 : i32
    %c0_i32_0 = arith.constant 0 : i32
    %c0_i32_1 = arith.constant 0 : i32
    return %c0_i32, %c0_i32_0 : i32, i32
  }
  func.func @transform_17(%arg0: i32) -> (i32, i32) {
    %c0_i32 = arith.constant 0 : i32
    %c0_i32_0 = arith.constant 0 : i32
    %c0_i32_1 = arith.constant 0 : i32
    return %c0_i32, %c0_i32_0 : i32, i32
  }
  func.func @transform_18(%arg0: i32) -> (i32, i32) {
    %c0_i32 = arith.constant 0 : i32
    %c0_i32_0 = arith.constant 0 : i32
    %c0_i32_1 = arith.constant 0 : i32
    return %c0_i32, %c0_i32_0 : i32, i32
  }
  func.func @transform_19(%arg0: i32) -> (i32, i32) {
    %c0_i32 = arith.constant 0 : i32
    %c0_i32_0 = arith.constant 0 : i32
    return %arg0, %c0_i32 : i32, i32
  }
}

</mosaic_0001>

<llo_original>
// kernel: tpu_custom_call.1
$region0: #{tpu_custom_call.1}
  #allocation0 [shape = 'u32[]', space=smem, size = 0x4, offset = 0x4, fixed_abs, tag = 'smem constant byte address 0x4 - core index']
  #allocation1 [shape = 'u32[144,128]{1,0:T(1,128)}', space=vmem, size = 0x12000, scoped, tag = 'internal scratch']
  %s0 = inlined_call_operand.hbm [shape: bf16[8,128], index: 0, kind: input, shape index: {}]
  %s1 = inlined_call_operand.hbm [shape: bf16[8,128], index: 1, kind: input, shape index: {}]
  %s2 = inlined_call_operand.hbm [shape: bf16[128,128], index: 2, kind: input, shape index: {}]
  %s3 = inlined_call_operand.vmem [shape: f32[1,128], index: 3, kind: input, shape index: {}]
  %s4 = inlined_call_operand.hbm [shape: bf16[128,128], index: 4, kind: input, shape index: {}]
  %s5 = inlined_call_operand.hbm [shape: bf16[128,128], index: 5, kind: input, shape index: {}]
  %s6 = inlined_call_operand.vmem [shape: f32[1,128], index: 6, kind: input, shape index: {}]
  %s7 = inlined_call_operand.hbm [shape: bf16[128,128], index: 7, kind: input, shape index: {}]
  %s8 = inlined_call_operand.vmem [shape: f32[1,128], index: 8, kind: input, shape index: {}]
  %s9 = inlined_call_operand.hbm [shape: bf16[128,128], index: 9, kind: input, shape index: {}]
  %s10 = inlined_call_operand.hbm [shape: bf16[128,128], index: 10, kind: input, shape index: {}]
  %s11 = inlined_call_operand.vmem [shape: f32[1,128], index: 11, kind: input, shape index: {}]
  %s12 = inlined_call_operand.hbm [shape: bf16[128,128], index: 12, kind: input, shape index: {}]
  %s13 = inlined_call_operand.hbm [shape: bf16[128,128], index: 13, kind: input, shape index: {}]
  %s14 = inlined_call_operand.vmem [shape: f32[1,128], index: 14, kind: input, shape index: {}]
  %s15 = inlined_call_operand.hbm [shape: bf16[128,128], index: 15, kind: input, shape index: {}]
  %s16 = inlined_call_operand.vmem [shape: f32[1,128], index: 16, kind: input, shape index: {}]
  %s17 = inlined_call_operand.hbm [shape: bf16[128,128], index: 17, kind: input, shape index: {}]
  %s18 = inlined_call_operand.vmem [shape: f32[1,128], index: 18, kind: input, shape index: {}]
  %s19 = inlined_call_operand.hbm [shape: f32[8,128], index: 19, kind: output, shape index: {}]
  %s20 = sld [smem:[#allocation0]]
  $region134: #{tpu_custom_call.1} parent=0
    _
  %s22 = ssub.s32 1, %s20
  %s23 = scalar_select 0, %s22, %s20
  $region1: #{tpu_custom_call.1} parent=0
    #allocation2 [shape = 'u8[2048]{0}', space=vmem, size = 0x800, scoped, tag = 'input window, operand 0, single buffered']
    #allocation3 [shape = 's32[1]{0}', space=sflag, size = 0x4, scoped, tag = 'scoped memory for tpu_custom_call.1']
    #allocation4 [shape = 's32[1]{0}', space=sflag, size = 0x4, scoped, tag = 'scoped memory for tpu_custom_call.1']
    #allocation5 [shape = 'u8[2048]{0}', space=vmem, size = 0x800, scoped, tag = 'input window, operand 1, single buffered']
    #allocation6 [shape = 's32[1]{0}', space=sflag, size = 0x4, scoped, tag = 'scoped memory for tpu_custom_call.1']
    #allocation7 [shape = 'u8[32768]{0}', space=vmem, size = 0x8000, scoped, tag = 'input window, operand 2, single buffered']
    #allocation8 [shape = 'u8[32768]{0}', space=vmem, size = 0x8000, scoped, tag = 'input window, operand 4, single buffered']
    #allocation9 [shape = 's32[1]{0}', space=sflag, size = 0x4, scoped, tag = 'scoped memory for tpu_custom_call.1']
    #allocation10 [shape = 'u8[32768]{0}', space=vmem, size = 0x8000, scoped, tag = 'input window, operand 5, single buffered']
    #allocation11 [shape = 'u8[32768]{0}', space=vmem, size = 0x8000, scoped, tag = 'input window, operand 7, single buffered']
    #allocation12 [shape = 's32[1]{0}', space=sflag, size = 0x4, scoped, tag = 'scoped memory for tpu_custom_call.1']
    #allocation13 [shape = 'u8[32768]{0}', space=vmem, size = 0x8000, scoped, tag = 'input window, operand 9, single buffered']
    #allocation14 [shape = 'u8[32768]{0}', space=vmem, size = 0x8000, scoped, tag = 'input window, operand 10, single buffered']
    #allocation15 [shape = 's32[1]{0}', space=sflag, size = 0x4, scoped, tag = 'scoped memory for tpu_custom_call.1']
    #allocation16 [shape = 'u8[32768]{0}', space=vmem, size = 0x8000, scoped, tag = 'input window, operand 12, single buffered']
    #allocation17 [shape = 'u8[32768]{0}', space=vmem, size = 0x8000, scoped, tag = 'input window, operand 13, single buffered']
    #allocation18 [shape = 's32[1]{0}', space=sflag, size = 0x4, scoped, tag = 'scoped memory for tpu_custom_call.1']
    #allocation19 [shape = 'u8[32768]{0}', space=vmem, size = 0x8000, scoped, tag = 'input window, operand 15, single buffered']
    #allocation20 [shape = 'u8[32768]{0}', space=vmem, size = 0x8000, scoped, tag = 'input window, operand 17, single buffered']
    #allocation21 [shape = 's32[1]{0}', space=sflag, size = 0x4, scoped, tag = 'scoped memory for tpu_custom_call.1']
    #allocation22 [shape = 'u8[4096]{0}', space=vmem, size = 0x1000, scoped, tag = 'output window, operand 0, single buffered']
    %24 = vsyncpa [#allocation3], 0
    %25 = vsyncpa [#allocation6], 0
    %26 = vsyncpa [#allocation9], 0
    %27 = vsyncpa [#allocation12], 0
    %28 = vsyncpa [#allocation15], 0
    %29 = vsyncpa [#allocation18], 0
    %30 = vsyncpa [#allocation21], 0
    %31 = vsyncpa [#allocation4], 0
    // Predicated region
    $region2: #{tpu_custom_call.1} parent=1 // pred_check
      _
    $region3: #{tpu_custom_call.1} parent=1 // pred_check_branch
      %33 = sbr.rel (0) target = $region5
    $region4: #{tpu_custom_call.1} parent=1 // pred_region
      %s35 = ssub.s32 64, 64
      %36 = vsyncadd [#allocation3], %s35
      %s38 = sshll.u32 [#allocation2], 4
      %s39 = int_to_ptr.vmem [resolvable:$true] %s38
      %41 = dma.hbm_to_vmem [thread:$0]  %s0, 64, %s39, [#allocation3]
    $region5: #{tpu_custom_call.1} parent=1 // pred_fallthru
      _
    // Predicated region
    $region6: #{tpu_custom_call.1} parent=1 // pred_check
      _
    $region7: #{tpu_custom_call.1} parent=1 // pred_check_branch
      %43 = sbr.rel (0) target = $region9
    $region8: #{tpu_custom_call.1} parent=1 // pred_region
      %s45 = ssub.s32 64, 64
      %46 = vsyncadd [#allocation6], %s45
      %s48 = sshll.u32 [#allocation5], 4
      %s49 = int_to_ptr.vmem [resolvable:$true] %s48
      %51 = dma.hbm_to_vmem [thread:$0]  %s1, 64, %s49, [#allocation6]
    $region9: #{tpu_custom_call.1} parent=1 // pred_fallthru
      _
    // Predicated region
    $region10: #{tpu_custom_call.1} parent=1 // pred_check
      _
    $region11: #{tpu_custom_call.1} parent=1 // pred_check_branch
      %53 = sbr.rel (0) target = $region13
    $region12: #{tpu_custom_call.1} parent=1 // pred_region
      %s55 = ssub.s32 1024, 1024
      %56 = vsyncadd [#allocation6], %s55
      %s57 = sshll.u32 [#allocation7], 4
      %s58 = int_to_ptr.vmem [resolvable:$true] %s57
      %63 = dma.hbm_to_vmem [thread:$0]  %s2, 1024, %s58, [#allocation6], 64, 64, 4
    $region13: #{tpu_custom_call.1} parent=1 // pred_fallthru
      _
    // Predicated region
    $region14: #{tpu_custom_call.1} parent=1 // pred_check
      _
    $region15: #{tpu_custom_call.1} parent=1 // pred_check_branch
      %65 = sbr.rel (0) target = $region17
    $region16: #{tpu_custom_call.1} parent=1 // pred_region
      _
    $region17: #{tpu_custom_call.1} parent=1 // pred_fallthru
      _
    // Predicated region
    $region18: #{tpu_custom_call.1} parent=1 // pred_check
      _
    $region19: #{tpu_custom_call.1} parent=1 // pred_check_branch
      %67 = sbr.rel (0) target = $region21
    $region20: #{tpu_custom_call.1} parent=1 // pred_region
      %s69 = ssub.s32 1024, 1024
      %70 = vsyncadd [#allocation9], %s69
      %s71 = sshll.u32 [#allocation8], 4
      %s72 = int_to_ptr.vmem [resolvable:$true] %s71
      %77 = dma.hbm_to_vmem [thread:$0]  %s4, 1024, %s72, [#allocation9], 64, 64, 4
    $region21: #{tpu_custom_call.1} parent=1 // pred_fallthru
      _
    // Predicated region
    $region22: #{tpu_custom_call.1} parent=1 // pred_check
      _
    $region23: #{tpu_custom_call.1} parent=1 // pred_check_branch
      %79 = sbr.rel (0) target = $region25
    $region24: #{tpu_custom_call.1} parent=1 // pred_region
      %s81 = ssub.s32 1024, 1024
      %82 = vsyncadd [#allocation9], %s81
      %s83 = sshll.u32 [#allocation10], 4
      %s84 = int_to_ptr.vmem [resolvable:$true] %s83
      %89 = dma.hbm_to_vmem [thread:$0]  %s5, 1024, %s84, [#allocation9], 64, 64, 4
    $region25: #{tpu_custom_call.1} parent=1 // pred_fallthru
      _
    // Predicated region
    $region26: #{tpu_custom_call.1} parent=1 // pred_check
      _
    $region27: #{tpu_custom_call.1} parent=1 // pred_check_branch
      %91 = sbr.rel (0) target = $region29
    $region28: #{tpu_custom_call.1} parent=1 // pred_region
      _
    $region29: #{tpu_custom_call.1} parent=1 // pred_fallthru
      _
    // Predicated region
    $region30: #{tpu_custom_call.1} parent=1 // pred_check
      _
    $region31: #{tpu_custom_call.1} parent=1 // pred_check_branch
      %93 = sbr.rel (0) target = $region33
    $region32: #{tpu_custom_call.1} parent=1 // pred_region
      %s95 = ssub.s32 1024, 1024
      %96 = vsyncadd [#allocation12], %s95
      %s97 = sshll.u32 [#allocation11], 4
      %s98 = int_to_ptr.vmem [resolvable:$true] %s97
      %103 = dma.hbm_to_vmem [thread:$0]  %s7, 1024, %s98, [#allocation12], 64, 64, 4
    $region33: #{tpu_custom_call.1} parent=1 // pred_fallthru
      _
    // Predicated region
    $region34: #{tpu_custom_call.1} parent=1 // pred_check
      _
    $region35: #{tpu_custom_call.1} parent=1 // pred_check_branch
      %105 = sbr.rel (0) target = $region37
    $region36: #{tpu_custom_call.1} parent=1 // pred_region
      _
    $region37: #{tpu_custom_call.1} parent=1 // pred_fallthru
      _
    // Predicated region
    $region38: #{tpu_custom_call.1} parent=1 // pred_check
      _
    $region39: #{tpu_custom_call.1} parent=1 // pred_check_branch
      %107 = sbr.rel (0) target = $region41
    $region40: #{tpu_custom_call.1} parent=1 // pred_region
      %s109 = ssub.s32 1024, 1024
      %110 = vsyncadd [#allocation12], %s109
      %s111 = sshll.u32 [#allocation13], 4
      %s112 = int_to_ptr.vmem [resolvable:$true] %s111
      %117 = dma.hbm_to_vmem [thread:$0]  %s9, 1024, %s112, [#allocation12], 64, 64, 4
    $region41: #{tpu_custom_call.1} parent=1 // pred_fallthru
      _
    // Predicated region
    $region42: #{tpu_custom_call.1} parent=1 // pred_check
      _
    $region43: #{tpu_custom_call.1} parent=1 // pred_check_branch
      %119 = sbr.rel (0) target = $region45
    $region44: #{tpu_custom_call.1} parent=1 // pred_region
      %s121 = ssub.s32 1024, 1024
      %122 = vsyncadd [#allocation15], %s121
      %s123 = sshll.u32 [#allocation14], 4
      %s124 = int_to_ptr.vmem [resolvable:$true] %s123
      %129 = dma.hbm_to_vmem [thread:$0]  %s10, 1024, %s124, [#allocation15], 64, 64, 4
    $region45: #{tpu_custom_call.1} parent=1 // pred_fallthru
      _
    // Predicated region
    $region46: #{tpu_custom_call.1} parent=1 // pred_check
      _
    $region47: #{tpu_custom_call.1} parent=1 // pred_check_branch
      %131 = sbr.rel (0) target = $region49
    $region48: #{tpu_custom_call.1} parent=1 // pred_region
      _
    $region49: #{tpu_custom_call.1} parent=1 // pred_fallthru
      _
    // Predicated region
    $region50: #{tpu_custom_call.1} parent=1 // pred_check
      _
    $region51: #{tpu_custom_call.1} parent=1 // pred_check_branch
      %133 = sbr.rel (0) target = $region53
    $region52: #{tpu_custom_call.1} parent=1 // pred_region
      %s135 = ssub.s32 1024, 1024
      %136 = vsyncadd [#allocation15], %s135
      %s137 = sshll.u32 [#allocation16], 4
      %s138 = int_to_ptr.vmem [resolvable:$true] %s137
      %143 = dma.hbm_to_vmem [thread:$0]  %s12, 1024, %s138, [#allocation15], 64, 64, 4
    $region53: #{tpu_custom_call.1} parent=1 // pred_fallthru
      _
    // Predicated region
    $region54: #{tpu_custom_call.1} parent=1 // pred_check
      _
    $region55: #{tpu_custom_call.1} parent=1 // pred_check_branch
      %145 = sbr.rel (0) target = $region57
    $region56: #{tpu_custom_call.1} parent=1 // pred_region
      %s147 = ssub.s32 1024, 1024
      %148 = vsyncadd [#allocation18], %s147
      %s149 = sshll.u32 [#allocation17], 4
      %s150 = int_to_ptr.vmem [resolvable:$true] %s149
      %155 = dma.hbm_to_vmem [thread:$0]  %s13, 1024, %s150, [#allocation18], 64, 64, 4
    $region57: #{tpu_custom_call.1} parent=1 // pred_fallthru
      _
    // Predicated region
    $region58: #{tpu_custom_call.1} parent=1 // pred_check
      _
    $region59: #{tpu_custom_call.1} parent=1 // pred_check_branch
      %157 = sbr.rel (0) target = $region61
    $region60: #{tpu_custom_call.1} parent=1 // pred_region
      _
    $region61: #{tpu_custom_call.1} parent=1 // pred_fallthru
      _
    // Predicated region
    $region62: #{tpu_custom_call.1} parent=1 // pred_check
      _
    $region63: #{tpu_custom_call.1} parent=1 // pred_check_branch
      %159 = sbr.rel (0) target = $region65
    $region64: #{tpu_custom_call.1} parent=1 // pred_region
      %s161 = ssub.s32 1024, 1024
      %162 = vsyncadd [#allocation18], %s161
      %s163 = sshll.u32 [#allocation19], 4
      %s164 = int_to_ptr.vmem [resolvable:$true] %s163
      %169 = dma.hbm_to_vmem [thread:$0]  %s15, 1024, %s164, [#allocation18], 64, 64, 4
    $region65: #{tpu_custom_call.1} parent=1 // pred_fallthru
      _
    // Predicated region
    $region66: #{tpu_custom_call.1} parent=1 // pred_check
      _
    $region67: #{tpu_custom_call.1} parent=1 // pred_check_branch
      %171 = sbr.rel (0) target = $region69
    $region68: #{tpu_custom_call.1} parent=1 // pred_region
      _
    $region69: #{tpu_custom_call.1} parent=1 // pred_fallthru
      _
    // Predicated region
    $region70: #{tpu_custom_call.1} parent=1 // pred_check
      _
    $region71: #{tpu_custom_call.1} parent=1 // pred_check_branch
      %173 = sbr.rel (0) target = $region73
    $region72: #{tpu_custom_call.1} parent=1 // pred_region
      %s175 = ssub.s32 1024, 1024
      %176 = vsyncadd [#allocation21], %s175
      %s177 = sshll.u32 [#allocation20], 4
      %s178 = int_to_ptr.vmem [resolvable:$true] %s177
      %183 = dma.hbm_to_vmem [thread:$0]  %s17, 1024, %s178, [#allocation21], 64, 64, 4
    $region73: #{tpu_custom_call.1} parent=1 // pred_fallthru
      _
    // Predicated region
    $region74: #{tpu_custom_call.1} parent=1 // pred_check
      _
    $region75: #{tpu_custom_call.1} parent=1 // pred_check_branch
      %185 = sbr.rel (0) target = $region77
    $region76: #{tpu_custom_call.1} parent=1 // pred_region
      _
    $region77: #{tpu_custom_call.1} parent=1 // pred_fallthru
      _
    // Predicated region
    $region78: #{tpu_custom_call.1} parent=1 // pred_check
      _
    $region79: #{tpu_custom_call.1} parent=1 // pred_check_branch
      %187 = sbr.rel (0) target = $region81
    $region80: #{tpu_custom_call.1} parent=1 // pred_region
      %188 = dma.done [#allocation3], 64
    $region81: #{tpu_custom_call.1} parent=1 // pred_fallthru
      _
    // Predicated region
    $region82: #{tpu_custom_call.1} parent=1 // pred_check
      _
    $region83: #{tpu_custom_call.1} parent=1 // pred_check_branch
      %190 = sbr.rel (0) target = $region85
    $region84: #{tpu_custom_call.1} parent=1 // pred_region
      %191 = dma.done [#allocation6], 64
    $region85: #{tpu_custom_call.1} parent=1 // pred_fallthru
      _
    // Predicated region
    $region86: #{tpu_custom_call.1} parent=1 // pred_check
      _
    $region87: #{tpu_custom_call.1} parent=1 // pred_check_branch
      %193 = sbr.rel (0) target = $region89
    $region88: #{tpu_custom_call.1} parent=1 // pred_region
      %194 = dma.done [#allocation6], 1024
    $region89: #{tpu_custom_call.1} parent=1 // pred_fallthru
      _
    // Predicated region
    $region90: #{tpu_custom_call.1} parent=1 // pred_check
      _
    $region91: #{tpu_custom_call.1} parent=1 // pred_check_branch
      %196 = sbr.rel (0) target = $region93
    $region92: #{tpu_custom_call.1} parent=1 // pred_region
      %197 = dma.done [#allocation9], 1024
    $region93: #{tpu_custom_call.1} parent=1 // pred_fallthru
      _
    // Predicated region
    $region94: #{tpu_custom_call.1} parent=1 // pred_check
      _
    $region95: #{tpu_custom_call.1} parent=1 // pred_check_branch
      %199 = sbr.rel (0) target = $region97
    $region96: #{tpu_custom_call.1} parent=1 // pred_region
      %200 = dma.done [#allocation9], 1024
    $region97: #{tpu_custom_call.1} parent=1 // pred_fallthru
      _
    // Predicated region
    $region98: #{tpu_custom_call.1} parent=1 // pred_check
      _
    $region99: #{tpu_custom_call.1} parent=1 // pred_check_branch
      %202 = sbr.rel (0) target = $region101
    $region100: #{tpu_custom_call.1} parent=1 // pred_region
      %203 = dma.done [#allocation12], 1024
    $region101: #{tpu_custom_call.1} parent=1 // pred_fallthru
      _
    // Predicated region
    $region102: #{tpu_custom_call.1} parent=1 // pred_check
      _
    $region103: #{tpu_custom_call.1} parent=1 // pred_check_branch
      %205 = sbr.rel (0) target = $region105
    $region104: #{tpu_custom_call.1} parent=1 // pred_region
      %206 = dma.done [#allocation12], 1024
    $region105: #{tpu_custom_call.1} parent=1 // pred_fallthru
      _
    // Predicated region
    $region106: #{tpu_custom_call.1} parent=1 // pred_check
      _
    $region107: #{tpu_custom_call.1} parent=1 // pred_check_branch
      %208 = sbr.rel (0) target = $region109
    $region108: #{tpu_custom_call.1} parent=1 // pred_region
      %209 = dma.done [#allocation15], 1024
    $region109: #{tpu_custom_call.1} parent=1 // pred_fallthru
      _
    // Predicated region
    $region110: #{tpu_custom_call.1} parent=1 // pred_check
      _
    $region111: #{tpu_custom_call.1} parent=1 // pred_check_branch
      %211 = sbr.rel (0) target = $region113
    $region112: #{tpu_custom_call.1} parent=1 // pred_region
      %212 = dma.done [#allocation15], 1024
    $region113: #{tpu_custom_call.1} parent=1 // pred_fallthru
      _
    // Predicated region
    $region114: #{tpu_custom_call.1} parent=1 // pred_check
      _
    $region115: #{tpu_custom_call.1} parent=1 // pred_check_branch
      %214 = sbr.rel (0) target = $region117
    $region116: #{tpu_custom_call.1} parent=1 // pred_region
      %215 = dma.done [#allocation18], 1024
    $region117: #{tpu_custom_call.1} parent=1 // pred_fallthru
      _
    // Predicated region
    $region118: #{tpu_custom_call.1} parent=1 // pred_check
      _
    $region119: #{tpu_custom_call.1} parent=1 // pred_check_branch
      %217 = sbr.rel (0) target = $region121
    $region120: #{tpu_custom_call.1} parent=1 // pred_region
      %218 = dma.done [#allocation18], 1024
    $region121: #{tpu_custom_call.1} parent=1 // pred_fallthru
      _
    // Predicated region
    $region122: #{tpu_custom_call.1} parent=1 // pred_check
      _
    $region123: #{tpu_custom_call.1} parent=1 // pred_check_branch
      %220 = sbr.rel (0) target = $region125
    $region124: #{tpu_custom_call.1} parent=1 // pred_region
      %221 = dma.done [#allocation21], 1024
    $region125: #{tpu_custom_call.1} parent=1 // pred_fallthru
      _
    %v223 = vld [vmem:[#allocation2] sm:$0xf]
    %v224 = vld [vmem:[#allocation5] sm:$0xf]
    %v225 = vld [vmem:[#allocation7] sm:$0xf]
    %v226 = vld [vmem:[#allocation7 + $0x4] sm:$0xf]
    %v227 = vld [vmem:[#allocation7 + $0x8] sm:$0xf]
    %v228 = vld [vmem:[#allocation7 + $0xc] sm:$0xf]
    %v229 = vld [vmem:[#allocation7 + $0x10] sm:$0xf]
    %v230 = vld [vmem:[#allocation7 + $0x14] sm:$0xf]
    %v231 = vld [vmem:[#allocation7 + $0x18] sm:$0xf]
    %v232 = vld [vmem:[#allocation7 + $0x1c] sm:$0xf]
    %v233 = vld [vmem:[#allocation7 + $0x20] sm:$0xf]
    %v234 = vld [vmem:[#allocation7 + $0x24] sm:$0xf]
    %v235 = vld [vmem:[#allocation7 + $0x28] sm:$0xf]
    %v236 = vld [vmem:[#allocation7 + $0x2c] sm:$0xf]
    %v237 = vld [vmem:[#allocation7 + $0x30] sm:$0xf]
    %v238 = vld [vmem:[#allocation7 + $0x34] sm:$0xf]
    %v239 = vld [vmem:[#allocation7 + $0x38] sm:$0xf]
    %v240 = vld [vmem:[#allocation7 + $0x3c] sm:$0xf]
    %v241 = vld [vmem:[%s3] sm:$0x1]
    %v243 = vlaneseq
    %v244 = vshrl.u32 %v243, 7
    %v245 = vsub.s32 0, %v244
    %v246 = vrot.slane %v241, %v245
    %v264 = vunpack.c.l.b16 %v225
    %v265 = vunpack.c.l.b16 %v226
    %v266 = vunpack.c.l.b16 %v227
    %v267 = vunpack.c.l.b16 %v228
    %v268 = vunpack.c.l.b16 %v229
    %v269 = vunpack.c.l.b16 %v230
    %v270 = vunpack.c.l.b16 %v231
    %v271 = vunpack.c.l.b16 %v232
    %v272 = vunpack.c.l.b16 %v233
    %v273 = vunpack.c.l.b16 %v234
    %v274 = vunpack.c.l.b16 %v235
    %v275 = vunpack.c.l.b16 %v236
    %v276 = vunpack.c.l.b16 %v237
    %v277 = vunpack.c.l.b16 %v238
    %v278 = vunpack.c.l.b16 %v239
    %v279 = vunpack.c.l.b16 %v240
    %v280 = vpack.c.b16 %v265, %v264
    %v281 = vpack.c.b16 %v267, %v266
    %v282 = vpack.c.b16 %v269, %v268
    %v283 = vpack.c.b16 %v271, %v270
    %v284 = vpack.c.b16 %v273, %v272
    %v285 = vpack.c.b16 %v275, %v274
    %v286 = vpack.c.b16 %v277, %v276
    %v287 = vpack.c.b16 %v279, %v278
    %296 = vmatprep.subr.bf16.mxu0 0
    %297 = vmatpush1.bf16.msra.mxu0 %v287
    %298 = vmatprep.subr.bf16.mxu0 0
    %299 = vmatpush1.bf16.msra.mxu0 %v286
    %300 = vmatprep.subr.bf16.mxu0 0
    %301 = vmatpush1.bf16.msra.mxu0 %v285
    %302 = vmatprep.subr.bf16.mxu0 0
    %303 = vmatpush1.bf16.msra.mxu0 %v284
    %304 = vmatprep.subr.bf16.mxu0 0
    %305 = vmatpush1.bf16.msra.mxu0 %v283
    %306 = vmatprep.subr.bf16.mxu0 0
    %307 = vmatpush1.bf16.msra.mxu0 %v282
    %308 = vmatprep.subr.bf16.mxu0 0
    %309 = vmatpush1.bf16.msra.mxu0 %v281
    %310 = vmatprep.subr.bf16.mxu0 0
    %311 = vmatpush1.bf16.msra.mxu0 %v280
    %312 = vmatprep.subr.bf16.mxu0 0
    %313 = vmatpush2.bf16.msra.mxu0 0
    %314 = vmatprep.subr.bf16.mxu0 0
    %315 = vmatpush2.bf16.msra.mxu0 0
    %316 = vmatprep.subr.bf16.mxu0 0
    %317 = vmatpush2.bf16.msra.mxu0 0
    %318 = vmatprep.subr.bf16.mxu0 0
    %319 = vmatpush2.bf16.msra.mxu0 0
    %320 = vmatprep.subr.bf16.mxu0 0
    %321 = vmatpush2.bf16.msra.mxu0 0
    %322 = vmatprep.subr.bf16.mxu0 0
    %323 = vmatpush2.bf16.msra.mxu0 0
    %324 = vmatprep.subr.bf16.mxu0 0
    %325 = vmatpush2.bf16.msra.mxu0 0
    %326 = vmatprep.subr.bf16.mxu0 0
    %327 = vmatpush2.bf16.msra.mxu0 0
    %328 = vmatprep.mubr.bf16.mxu0 0
    %329 = vmatmul.mubr.bf16.gmra.mxu0 %v223
    %v330 = vpop.f32.mrf.mxu0
    %v331 = vadd.f32 %v246, %v330
    %v332 = vpop.f32.mrf.mxu0
    %v333 = vpop.f32.mrf.mxu0
    %v334 = vpop.f32.mrf.mxu0
    %335 = vdwg.mxu0
    %v336 = vand.u32 2147483647, %v331
    %337 = vadd.xlane.f32.xlu0 %v336
    %v338 = vpop.xlane.xlu0 %337
    %v339 = vmul.f32 %v338, 0.03125
    %v340 = vmax.f32 %v339, 1e-08
    %v341 = vrcp.pop %v340
    %v342 = vmul.f32 %v331, %v341
    %v343 = vpack.c.bf16 %v342, %v342
    %v344 = vld [vmem:[#allocation8] sm:$0xf]
    %v345 = vld [vmem:[#allocation8 + $0x4] sm:$0xf]
    %v346 = vld [vmem:[#allocation8 + $0x8] sm:$0xf]
    %v347 = vld [vmem:[#allocation8 + $0xc] sm:$0xf]
    %v348 = vld [vmem:[#allocation8 + $0x10] sm:$0xf]
    %v349 = vld [vmem:[#allocation8 + $0x14] sm:$0xf]
    %v350 = vld [vmem:[#allocation8 + $0x18] sm:$0xf]
    %v351 = vld [vmem:[#allocation8 + $0x1c] sm:$0xf]
    %v352 = vld [vmem:[#allocation8 + $0x20] sm:$0xf]
    %v353 = vld [vmem:[#allocation8 + $0x24] sm:$0xf]
    %v354 = vld [vmem:[#allocation8 + $0x28] sm:$0xf]
    %v355 = vld [vmem:[#allocation8 + $0x2c] sm:$0xf]
    %v356 = vld [vmem:[#allocation8 + $0x30] sm:$0xf]
    %v357 = vld [vmem:[#allocation8 + $0x34] sm:$0xf]
    %v358 = vld [vmem:[#allocation8 + $0x38] sm:$0xf]
    %v359 = vld [vmem:[#allocation8 + $0x3c] sm:$0xf]
    %v360 = vld [vmem:[#allocation10] sm:$0xf]
    %v361 = vld [vmem:[#allocation10 + $0x4] sm:$0xf]
    %v362 = vld [vmem:[#allocation10 + $0x8] sm:$0xf]
    %v363 = vld [vmem:[#allocation10 + $0xc] sm:$0xf]
    %v364 = vld [vmem:[#allocation10 + $0x10] sm:$0xf]
    %v365 = vld [vmem:[#allocation10 + $0x14] sm:$0xf]
    %v366 = vld [vmem:[#allocation10 + $0x18] sm:$0xf]
    %v367 = vld [vmem:[#allocation10 + $0x1c] sm:$0xf]
    %v368 = vld [vmem:[#allocation10 + $0x20] sm:$0xf]
    %v369 = vld [vmem:[#allocation10 + $0x24] sm:$0xf]
    %v370 = vld [vmem:[#allocation10 + $0x28] sm:$0xf]
    %v371 = vld [vmem:[#allocation10 + $0x2c] sm:$0xf]
    %v372 = vld [vmem:[#allocation10 + $0x30] sm:$0xf]
    %v373 = vld [vmem:[#allocation10 + $0x34] sm:$0xf]
    %v374 = vld [vmem:[#allocation10 + $0x38] sm:$0xf]
    %v375 = vld [vmem:[#allocation10 + $0x3c] sm:$0xf]
    %v392 = vunpack.c.l.b16 %v360
    %v393 = vunpack.c.l.b16 %v361
    %v394 = vunpack.c.l.b16 %v362
    %v395 = vunpack.c.l.b16 %v363
    %v396 = vunpack.c.l.b16 %v364
    %v397 = vunpack.c.l.b16 %v365
    %v398 = vunpack.c.l.b16 %v366
    %v399 = vunpack.c.l.b16 %v367
    %v400 = vunpack.c.l.b16 %v368
    %v401 = vunpack.c.l.b16 %v369
    %v402 = vunpack.c.l.b16 %v370
    %v403 = vunpack.c.l.b16 %v371
    %v404 = vunpack.c.l.b16 %v372
    %v405 = vunpack.c.l.b16 %v373
    %v406 = vunpack.c.l.b16 %v374
    %v407 = vunpack.c.l.b16 %v375
    %v408 = vpack.c.b16 %v393, %v392
    %v409 = vpack.c.b16 %v395, %v394
    %v410 = vpack.c.b16 %v397, %v396
    %v411 = vpack.c.b16 %v399, %v398
    %v412 = vpack.c.b16 %v401, %v400
    %v413 = vpack.c.b16 %v403, %v402
    %v414 = vpack.c.b16 %v405, %v404
    %v415 = vpack.c.b16 %v407, %v406
    %424 = vmatprep.subr.bf16.mxu0 0
    %425 = vmatpush1.bf16.msra.mxu0 %v415
    %426 = vmatprep.subr.bf16.mxu0 0
    %427 = vmatpush1.bf16.msra.mxu0 %v414
    %428 = vmatprep.subr.bf16.mxu0 0
    %429 = vmatpush1.bf16.msra.mxu0 %v413
    %430 = vmatprep.subr.bf16.mxu0 0
    %431 = vmatpush1.bf16.msra.mxu0 %v412
    %432 = vmatprep.subr.bf16.mxu0 0
    %433 = vmatpush1.bf16.msra.mxu0 %v411
    %434 = vmatprep.subr.bf16.mxu0 0
    %435 = vmatpush1.bf16.msra.mxu0 %v410
    %436 = vmatprep.subr.bf16.mxu0 0
    %437 = vmatpush1.bf16.msra.mxu0 %v409
    %438 = vmatprep.subr.bf16.mxu0 0
    %439 = vmatpush1.bf16.msra.mxu0 %v408
    %440 = vmatprep.subr.bf16.mxu0 0
    %441 = vmatpush2.bf16.msra.mxu0 0
    %442 = vmatprep.subr.bf16.mxu0 0
    %443 = vmatpush2.bf16.msra.mxu0 0
    %444 = vmatprep.subr.bf16.mxu0 0
    %445 = vmatpush2.bf16.msra.mxu0 0
    %446 = vmatprep.subr.bf16.mxu0 0
    %447 = vmatpush2.bf16.msra.mxu0 0
    %448 = vmatprep.subr.bf16.mxu0 0
    %449 = vmatpush2.bf16.msra.mxu0 0
    %450 = vmatprep.subr.bf16.mxu0 0
    %451 = vmatpush2.bf16.msra.mxu0 0
    %452 = vmatprep.subr.bf16.mxu0 0
    %453 = vmatpush2.bf16.msra.mxu0 0
    %454 = vmatprep.subr.bf16.mxu0 0
    %455 = vmatpush2.bf16.msra.mxu0 0
    %456 = vmatprep.mubr.bf16.mxu0 0
    %457 = vmatmul.mubr.bf16.gmra.mxu0 %v224
    %v458 = vpop.f32.mrf.mxu0
    %v459 = vadd.f32 0.0, %v458
    %v460 = vpop.f32.mrf.mxu0
    %v461 = vpop.f32.mrf.mxu0
    %v462 = vpop.f32.mrf.mxu0
    %463 = vdwg.mxu0
    %v480 = vunpack.c.l.b16 %v344
    %v481 = vunpack.c.l.b16 %v345
    %v482 = vunpack.c.l.b16 %v346
    %v483 = vunpack.c.l.b16 %v347
    %v484 = vunpack.c.l.b16 %v348
    %v485 = vunpack.c.l.b16 %v349
    %v486 = vunpack.c.l.b16 %v350
    %v487 = vunpack.c.l.b16 %v351
    %v488 = vunpack.c.l.b16 %v352
    %v489 = vunpack.c.l.b16 %v353
    %v490 = vunpack.c.l.b16 %v354
    %v491 = vunpack.c.l.b16 %v355
    %v492 = vunpack.c.l.b16 %v356
    %v493 = vunpack.c.l.b16 %v357
    %v494 = vunpack.c.l.b16 %v358
    %v495 = vunpack.c.l.b16 %v359
    %v496 = vpack.c.b16 %v481, %v480
    %v497 = vpack.c.b16 %v483, %v482
    %v498 = vpack.c.b16 %v485, %v484
    %v499 = vpack.c.b16 %v487, %v486
    %v500 = vpack.c.b16 %v489, %v488
    %v501 = vpack.c.b16 %v491, %v490
    %v502 = vpack.c.b16 %v493, %v492
    %v503 = vpack.c.b16 %v495, %v494
    %512 = vmatprep.subr.bf16.mxu0 0
    %513 = vmatpush1.bf16.msra.mxu0 %v503
    %514 = vmatprep.subr.bf16.mxu0 0
    %515 = vmatpush1.bf16.msra.mxu0 %v502
    %516 = vmatprep.subr.bf16.mxu0 0
    %517 = vmatpush1.bf16.msra.mxu0 %v501
    %518 = vmatprep.subr.bf16.mxu0 0
    %519 = vmatpush1.bf16.msra.mxu0 %v500
    %520 = vmatprep.subr.bf16.mxu0 0
    %521 = vmatpush1.bf16.msra.mxu0 %v499
    %522 = vmatprep.subr.bf16.mxu0 0
    %523 = vmatpush1.bf16.msra.mxu0 %v498
    %524 = vmatprep.subr.bf16.mxu0 0
    %525 = vmatpush1.bf16.msra.mxu0 %v497
    %526 = vmatprep.subr.bf16.mxu0 0
    %527 = vmatpush1.bf16.msra.mxu0 %v496
    %528 = vmatprep.subr.bf16.mxu0 0
    %529 = vmatpush2.bf16.msra.mxu0 0
    %530 = vmatprep.subr.bf16.mxu0 0
    %531 = vmatpush2.bf16.msra.mxu0 0
    %532 = vmatprep.subr.bf16.mxu0 0
    %533 = vmatpush2.bf16.msra.mxu0 0
    %534 = vmatprep.subr.bf16.mxu0 0
    %535 = vmatpush2.bf16.msra.mxu0 0
    %536 = vmatprep.subr.bf16.mxu0 0
    %537 = vmatpush2.bf16.msra.mxu0 0
    %538 = vmatprep.subr.bf16.mxu0 0
    %539 = vmatpush2.bf16.msra.mxu0 0
    %540 = vmatprep.subr.bf16.mxu0 0
    %541 = vmatpush2.bf16.msra.mxu0 0
    %542 = vmatprep.subr.bf16.mxu0 0
    %543 = vmatpush2.bf16.msra.mxu0 0
    %544 = vmatprep.mubr.bf16.mxu0 0
    %545 = vmatmul.mubr.bf16.gmra.mxu0 %v343
    %v546 = vpop.f32.mrf.mxu0
    %v547 = vadd.f32 %v459, %v546
    %v548 = vpop.f32.mrf.mxu0
    %v549 = vpop.f32.mrf.mxu0
    %v550 = vpop.f32.mrf.mxu0
    %551 = vdwg.mxu0
    %v552 = vld [vmem:[%s6] sm:$0x1]
    %v554 = vlaneseq
    %v555 = vshrl.u32 %v554, 7
    %v556 = vsub.s32 0, %v555
    %v557 = vrot.slane %v552, %v556
    %v559 = vadd.f32 %v547, %v557
    %vm560 = vcmp.gt.f32.partialorder %v559, 0.0
    %v561 = vmul.f32 %v559, 1.442695
    %v562 = vpow.pop %v561
    %v563 = vsub.f32 %v562, 1.0
    %v564 = vsel %vm560, %v559, %v563
    %v565 = vpack.c.bf16 %v564, %v564
    %v566 = vld [vmem:[#allocation11] sm:$0xf]
    %v567 = vld [vmem:[#allocation11 + $0x4] sm:$0xf]
    %v568 = vld [vmem:[#allocation11 + $0x8] sm:$0xf]
    %v569 = vld [vmem:[#allocation11 + $0xc] sm:$0xf]
    %v570 = vld [vmem:[#allocation11 + $0x10] sm:$0xf]
    %v571 = vld [vmem:[#allocation11 + $0x14] sm:$0xf]
    %v572 = vld [vmem:[#allocation11 + $0x18] sm:$0xf]
    %v573 = vld [vmem:[#allocation11 + $0x1c] sm:$0xf]
    %v574 = vld [vmem:[#allocation11 + $0x20] sm:$0xf]
    %v575 = vld [vmem:[#allocation11 + $0x24] sm:$0xf]
    %v576 = vld [vmem:[#allocation11 + $0x28] sm:$0xf]
    %v577 = vld [vmem:[#allocation11 + $0x2c] sm:$0xf]
    %v578 = vld [vmem:[#allocation11 + $0x30] sm:$0xf]
    %v579 = vld [vmem:[#allocation11 + $0x34] sm:$0xf]
    %v580 = vld [vmem:[#allocation11 + $0x38] sm:$0xf]
    %v581 = vld [vmem:[#allocation11 + $0x3c] sm:$0xf]
    %v582 = vld [vmem:[%s8] sm:$0x1]
    %v584 = vlaneseq
    %v585 = vshrl.u32 %v584, 7
    %v586 = vsub.s32 0, %v585
    %v587 = vrot.slane %v582, %v586
    %v605 = vunpack.c.l.b16 %v566
    %v606 = vunpack.c.l.b16 %v567
    %v607 = vunpack.c.l.b16 %v568
    %v608 = vunpack.c.l.b16 %v569
    %v609 = vunpack.c.l.b16 %v570
    %v610 = vunpack.c.l.b16 %v571
    %v611 = vunpack.c.l.b16 %v572
    %v612 = vunpack.c.l.b16 %v573
    %v613 = vunpack.c.l.b16 %v574
    %v614 = vunpack.c.l.b16 %v575
    %v615 = vunpack.c.l.b16 %v576
    %v616 = vunpack.c.l.b16 %v577
    %v617 = vunpack.c.l.b16 %v578
    %v618 = vunpack.c.l.b16 %v579
    %v619 = vunpack.c.l.b16 %v580
    %v620 = vunpack.c.l.b16 %v581
    %v621 = vpack.c.b16 %v606, %v605
    %v622 = vpack.c.b16 %v608, %v607
    %v623 = vpack.c.b16 %v610, %v609
    %v624 = vpack.c.b16 %v612, %v611
    %v625 = vpack.c.b16 %v614, %v613
    %v626 = vpack.c.b16 %v616, %v615
    %v627 = vpack.c.b16 %v618, %v617
    %v628 = vpack.c.b16 %v620, %v619
    %637 = vmatprep.subr.bf16.mxu0 0
    %638 = vmatpush1.bf16.msra.mxu0 %v628
    %639 = vmatprep.subr.bf16.mxu0 0
    %640 = vmatpush1.bf16.msra.mxu0 %v627
    %641 = vmatprep.subr.bf16.mxu0 0
    %642 = vmatpush1.bf16.msra.mxu0 %v626
    %643 = vmatprep.subr.bf16.mxu0 0
    %644 = vmatpush1.bf16.msra.mxu0 %v625
    %645 = vmatprep.subr.bf16.mxu0 0
    %646 = vmatpush1.bf16.msra.mxu0 %v624
    %647 = vmatprep.subr.bf16.mxu0 0
    %648 = vmatpush1.bf16.msra.mxu0 %v623
    %649 = vmatprep.subr.bf16.mxu0 0
    %650 = vmatpush1.bf16.msra.mxu0 %v622
    %651 = vmatprep.subr.bf16.mxu0 0
    %652 = vmatpush1.bf16.msra.mxu0 %v621
    %653 = vmatprep.subr.bf16.mxu0 0
    %654 = vmatpush2.bf16.msra.mxu0 0
    %655 = vmatprep.subr.bf16.mxu0 0
    %656 = vmatpush2.bf16.msra.mxu0 0
    %657 = vmatprep.subr.bf16.mxu0 0
    %658 = vmatpush2.bf16.msra.mxu0 0
    %659 = vmatprep.subr.bf16.mxu0 0
    %660 = vmatpush2.bf16.msra.mxu0 0
    %661 = vmatprep.subr.bf16.mxu0 0
    %662 = vmatpush2.bf16.msra.mxu0 0
    %663 = vmatprep.subr.bf16.mxu0 0
    %664 = vmatpush2.bf16.msra.mxu0 0
    %665 = vmatprep.subr.bf16.mxu0 0
    %666 = vmatpush2.bf16.msra.mxu0 0
    %667 = vmatprep.subr.bf16.mxu0 0
    %668 = vmatpush2.bf16.msra.mxu0 0
    %669 = vmatprep.mubr.bf16.mxu0 0
    %670 = vmatmul.mubr.bf16.gmra.mxu0 %v565
    %v671 = vpop.f32.mrf.mxu0
    %v672 = vadd.f32 %v587, %v671
    %v673 = vpop.f32.mrf.mxu0
    %v674 = vpop.f32.mrf.mxu0
    %v675 = vpop.f32.mrf.mxu0
    %676 = vdwg.mxu0
    %vm677 = vcmp.gt.f32.partialorder %v672, 0.0
    %v678 = vmul.f32 %v672, 1.442695
    %v679 = vpow.pop %v678
    %v680 = vsub.f32 %v679, 1.0
    %v681 = vsel %vm677, %v672, %v680
    %v682 = vpack.c.bf16 %v681, %v681
    %v683 = vld [vmem:[#allocation13] sm:$0xf]
    %v684 = vld [vmem:[#allocation13 + $0x4] sm:$0xf]
    %v685 = vld [vmem:[#allocation13 + $0x8] sm:$0xf]
    %v686 = vld [vmem:[#allocation13 + $0xc] sm:$0xf]
    %v687 = vld [vmem:[#allocation13 + $0x10] sm:$0xf]
    %v688 = vld [vmem:[#allocation13 + $0x14] sm:$0xf]
    %v689 = vld [vmem:[#allocation13 + $0x18] sm:$0xf]
    %v690 = vld [vmem:[#allocation13 + $0x1c] sm:$0xf]
    %v691 = vld [vmem:[#allocation13 + $0x20] sm:$0xf]
    %v692 = vld [vmem:[#allocation13 + $0x24] sm:$0xf]
    %v693 = vld [vmem:[#allocation13 + $0x28] sm:$0xf]
    %v694 = vld [vmem:[#allocation13 + $0x2c] sm:$0xf]
    %v695 = vld [vmem:[#allocation13 + $0x30] sm:$0xf]
    %v696 = vld [vmem:[#allocation13 + $0x34] sm:$0xf]
    %v697 = vld [vmem:[#allocation13 + $0x38] sm:$0xf]
    %v698 = vld [vmem:[#allocation13 + $0x3c] sm:$0xf]
    %v699 = vld [vmem:[#allocation14] sm:$0xf]
    %v700 = vld [vmem:[#allocation14 + $0x4] sm:$0xf]
    %v701 = vld [vmem:[#allocation14 + $0x8] sm:$0xf]
    %v702 = vld [vmem:[#allocation14 + $0xc] sm:$0xf]
    %v703 = vld [vmem:[#allocation14 + $0x10] sm:$0xf]
    %v704 = vld [vmem:[#allocation14 + $0x14] sm:$0xf]
    %v705 = vld [vmem:[#allocation14 + $0x18] sm:$0xf]
    %v706 = vld [vmem:[#allocation14 + $0x1c] sm:$0xf]
    %v707 = vld [vmem:[#allocation14 + $0x20] sm:$0xf]
    %v708 = vld [vmem:[#allocation14 + $0x24] sm:$0xf]
    %v709 = vld [vmem:[#allocation14 + $0x28] sm:$0xf]
    %v710 = vld [vmem:[#allocation14 + $0x2c] sm:$0xf]
    %v711 = vld [vmem:[#allocation14 + $0x30] sm:$0xf]
    %v712 = vld [vmem:[#allocation14 + $0x34] sm:$0xf]
    %v713 = vld [vmem:[#allocation14 + $0x38] sm:$0xf]
    %v714 = vld [vmem:[#allocation14 + $0x3c] sm:$0xf]
    %v715 = vld [vmem:[%s11] sm:$0x1]
    %v717 = vlaneseq
    %v718 = vshrl.u32 %v717, 7
    %v719 = vsub.s32 0, %v718
    %v720 = vrot.slane %v715, %v719
    %v738 = vunpack.c.l.b16 %v699
    %v739 = vunpack.c.l.b16 %v700
    %v740 = vunpack.c.l.b16 %v701
    %v741 = vunpack.c.l.b16 %v702
    %v742 = vunpack.c.l.b16 %v703
    %v743 = vunpack.c.l.b16 %v704
    %v744 = vunpack.c.l.b16 %v705
    %v745 = vunpack.c.l.b16 %v706
    %v746 = vunpack.c.l.b16 %v707
    %v747 = vunpack.c.l.b16 %v708
    %v748 = vunpack.c.l.b16 %v709
    %v749 = vunpack.c.l.b16 %v710
    %v750 = vunpack.c.l.b16 %v711
    %v751 = vunpack.c.l.b16 %v712
    %v752 = vunpack.c.l.b16 %v713
    %v753 = vunpack.c.l.b16 %v714
    %v754 = vpack.c.b16 %v739, %v738
    %v755 = vpack.c.b16 %v741, %v740
    %v756 = vpack.c.b16 %v743, %v742
    %v757 = vpack.c.b16 %v745, %v744
    %v758 = vpack.c.b16 %v747, %v746
    %v759 = vpack.c.b16 %v749, %v748
    %v760 = vpack.c.b16 %v751, %v750
    %v761 = vpack.c.b16 %v753, %v752
    %770 = vmatprep.subr.bf16.mxu0 0
    %771 = vmatpush1.bf16.msra.mxu0 %v761
    %772 = vmatprep.subr.bf16.mxu0 0
    %773 = vmatpush1.bf16.msra.mxu0 %v760
    %774 = vmatprep.subr.bf16.mxu0 0
    %775 = vmatpush1.bf16.msra.mxu0 %v759
    %776 = vmatprep.subr.bf16.mxu0 0
    %777 = vmatpush1.bf16.msra.mxu0 %v758
    %778 = vmatprep.subr.bf16.mxu0 0
    %779 = vmatpush1.bf16.msra.mxu0 %v757
    %780 = vmatprep.subr.bf16.mxu0 0
    %781 = vmatpush1.bf16.msra.mxu0 %v756
    %782 = vmatprep.subr.bf16.mxu0 0
    %783 = vmatpush1.bf16.msra.mxu0 %v755
    %784 = vmatprep.subr.bf16.mxu0 0
    %785 = vmatpush1.bf16.msra.mxu0 %v754
    %786 = vmatprep.subr.bf16.mxu0 0
    %787 = vmatpush2.bf16.msra.mxu0 0
    %788 = vmatprep.subr.bf16.mxu0 0
    %789 = vmatpush2.bf16.msra.mxu0 0
    %790 = vmatprep.subr.bf16.mxu0 0
    %791 = vmatpush2.bf16.msra.mxu0 0
    %792 = vmatprep.subr.bf16.mxu0 0
    %793 = vmatpush2.bf16.msra.mxu0 0
    %794 = vmatprep.subr.bf16.mxu0 0
    %795 = vmatpush2.bf16.msra.mxu0 0
    %796 = vmatprep.subr.bf16.mxu0 0
    %797 = vmatpush2.bf16.msra.mxu0 0
    %798 = vmatprep.subr.bf16.mxu0 0
    %799 = vmatpush2.bf16.msra.mxu0 0
    %800 = vmatprep.subr.bf16.mxu0 0
    %801 = vmatpush2.bf16.msra.mxu0 0
    %802 = vmatprep.mubr.bf16.mxu0 0
    %803 = vmatmul.mubr.bf16.gmra.mxu0 %v223
    %v804 = vpop.f32.mrf.mxu0
    %v805 = vadd.f32 %v720, %v804
    %v806 = vpop.f32.mrf.mxu0
    %v807 = vpop.f32.mrf.mxu0
    %v808 = vpop.f32.mrf.mxu0
    %809 = vdwg.mxu0
    %v810 = vand.u32 2147483647, %v805
    %811 = vadd.xlane.f32.xlu0 %v810
    %v812 = vpop.xlane.xlu0 %811
    %v813 = vmul.f32 %v812, 0.03125
    %v814 = vmax.f32 %v813, 1e-08
    %v815 = vrcp.pop %v814
    %v816 = vmul.f32 %v805, %v815
    %v817 = vpack.c.bf16 %v816, %v816
    %v818 = vld [vmem:[#allocation16] sm:$0xf]
    %v819 = vld [vmem:[#allocation16 + $0x4] sm:$0xf]
    %v820 = vld [vmem:[#allocation16 + $0x8] sm:$0xf]
    %v821 = vld [vmem:[#allocation16 + $0xc] sm:$0xf]
    %v822 = vld [vmem:[#allocation16 + $0x10] sm:$0xf]
    %v823 = vld [vmem:[#allocation16 + $0x14] sm:$0xf]
    %v824 = vld [vmem:[#allocation16 + $0x18] sm:$0xf]
    %v825 = vld [vmem:[#allocation16 + $0x1c] sm:$0xf]
    %v826 = vld [vmem:[#allocation16 + $0x20] sm:$0xf]
    %v827 = vld [vmem:[#allocation16 + $0x24] sm:$0xf]
    %v828 = vld [vmem:[#allocation16 + $0x28] sm:$0xf]
    %v829 = vld [vmem:[#allocation16 + $0x2c] sm:$0xf]
    %v830 = vld [vmem:[#allocation16 + $0x30] sm:$0xf]
    %v831 = vld [vmem:[#allocation16 + $0x34] sm:$0xf]
    %v832 = vld [vmem:[#allocation16 + $0x38] sm:$0xf]
    %v833 = vld [vmem:[#allocation16 + $0x3c] sm:$0xf]
    %v834 = vld [vmem:[#allocation17] sm:$0xf]
    %v835 = vld [vmem:[#allocation17 + $0x4] sm:$0xf]
    %v836 = vld [vmem:[#allocation17 + $0x8] sm:$0xf]
    %v837 = vld [vmem:[#allocation17 + $0xc] sm:$0xf]
    %v838 = vld [vmem:[#allocation17 + $0x10] sm:$0xf]
    %v839 = vld [vmem:[#allocation17 + $0x14] sm:$0xf]
    %v840 = vld [vmem:[#allocation17 + $0x18] sm:$0xf]
    %v841 = vld [vmem:[#allocation17 + $0x1c] sm:$0xf]
    %v842 = vld [vmem:[#allocation17 + $0x20] sm:$0xf]
    %v843 = vld [vmem:[#allocation17 + $0x24] sm:$0xf]
    %v844 = vld [vmem:[#allocation17 + $0x28] sm:$0xf]
    %v845 = vld [vmem:[#allocation17 + $0x2c] sm:$0xf]
    %v846 = vld [vmem:[#allocation17 + $0x30] sm:$0xf]
    %v847 = vld [vmem:[#allocation17 + $0x34] sm:$0xf]
    %v848 = vld [vmem:[#allocation17 + $0x38] sm:$0xf]
    %v849 = vld [vmem:[#allocation17 + $0x3c] sm:$0xf]
    %v866 = vunpack.c.l.b16 %v834
    %v867 = vunpack.c.l.b16 %v835
    %v868 = vunpack.c.l.b16 %v836
    %v869 = vunpack.c.l.b16 %v837
    %v870 = vunpack.c.l.b16 %v838
    %v871 = vunpack.c.l.b16 %v839
    %v872 = vunpack.c.l.b16 %v840
    %v873 = vunpack.c.l.b16 %v841
    %v874 = vunpack.c.l.b16 %v842
    %v875 = vunpack.c.l.b16 %v843
    %v876 = vunpack.c.l.b16 %v844
    %v877 = vunpack.c.l.b16 %v845
    %v878 = vunpack.c.l.b16 %v846
    %v879 = vunpack.c.l.b16 %v847
    %v880 = vunpack.c.l.b16 %v848
    %v881 = vunpack.c.l.b16 %v849
    %v882 = vpack.c.b16 %v867, %v866
    %v883 = vpack.c.b16 %v869, %v868
    %v884 = vpack.c.b16 %v871, %v870
    %v885 = vpack.c.b16 %v873, %v872
    %v886 = vpack.c.b16 %v875, %v874
    %v887 = vpack.c.b16 %v877, %v876
    %v888 = vpack.c.b16 %v879, %v878
    %v889 = vpack.c.b16 %v881, %v880
    %898 = vmatprep.subr.bf16.mxu0 0
    %899 = vmatpush1.bf16.msra.mxu0 %v889
    %900 = vmatprep.subr.bf16.mxu0 0
    %901 = vmatpush1.bf16.msra.mxu0 %v888
    %902 = vmatprep.subr.bf16.mxu0 0
    %903 = vmatpush1.bf16.msra.mxu0 %v887
    %904 = vmatprep.subr.bf16.mxu0 0
    %905 = vmatpush1.bf16.msra.mxu0 %v886
    %906 = vmatprep.subr.bf16.mxu0 0
    %907 = vmatpush1.bf16.msra.mxu0 %v885
    %908 = vmatprep.subr.bf16.mxu0 0
    %909 = vmatpush1.bf16.msra.mxu0 %v884
    %910 = vmatprep.subr.bf16.mxu0 0
    %911 = vmatpush1.bf16.msra.mxu0 %v883
    %912 = vmatprep.subr.bf16.mxu0 0
    %913 = vmatpush1.bf16.msra.mxu0 %v882
    %914 = vmatprep.subr.bf16.mxu0 0
    %915 = vmatpush2.bf16.msra.mxu0 0
    %916 = vmatprep.subr.bf16.mxu0 0
    %917 = vmatpush2.bf16.msra.mxu0 0
    %918 = vmatprep.subr.bf16.mxu0 0
    %919 = vmatpush2.bf16.msra.mxu0 0
    %920 = vmatprep.subr.bf16.mxu0 0
    %921 = vmatpush2.bf16.msra.mxu0 0
    %922 = vmatprep.subr.bf16.mxu0 0
    %923 = vmatpush2.bf16.msra.mxu0 0
    %924 = vmatprep.subr.bf16.mxu0 0
    %925 = vmatpush2.bf16.msra.mxu0 0
    %926 = vmatprep.subr.bf16.mxu0 0
    %927 = vmatpush2.bf16.msra.mxu0 0
    %928 = vmatprep.subr.bf16.mxu0 0
    %929 = vmatpush2.bf16.msra.mxu0 0
    %930 = vmatprep.mubr.bf16.mxu0 0
    %931 = vmatmul.mubr.bf16.gmra.mxu0 %v224
    %v932 = vpop.f32.mrf.mxu0
    %v933 = vadd.f32 0.0, %v932
    %v934 = vpop.f32.mrf.mxu0
    %v935 = vpop.f32.mrf.mxu0
    %v936 = vpop.f32.mrf.mxu0
    %937 = vdwg.mxu0
    %v954 = vunpack.c.l.b16 %v818
    %v955 = vunpack.c.l.b16 %v819
    %v956 = vunpack.c.l.b16 %v820
    %v957 = vunpack.c.l.b16 %v821
    %v958 = vunpack.c.l.b16 %v822
    %v959 = vunpack.c.l.b16 %v823
    %v960 = vunpack.c.l.b16 %v824
    %v961 = vunpack.c.l.b16 %v825
    %v962 = vunpack.c.l.b16 %v826
    %v963 = vunpack.c.l.b16 %v827
    %v964 = vunpack.c.l.b16 %v828
    %v965 = vunpack.c.l.b16 %v829
    %v966 = vunpack.c.l.b16 %v830
    %v967 = vunpack.c.l.b16 %v831
    %v968 = vunpack.c.l.b16 %v832
    %v969 = vunpack.c.l.b16 %v833
    %v970 = vpack.c.b16 %v955, %v954
    %v971 = vpack.c.b16 %v957, %v956
    %v972 = vpack.c.b16 %v959, %v958
    %v973 = vpack.c.b16 %v961, %v960
    %v974 = vpack.c.b16 %v963, %v962
    %v975 = vpack.c.b16 %v965, %v964
    %v976 = vpack.c.b16 %v967, %v966
    %v977 = vpack.c.b16 %v969, %v968
    %986 = vmatprep.subr.bf16.mxu0 0
    %987 = vmatpush1.bf16.msra.mxu0 %v977
    %988 = vmatprep.subr.bf16.mxu0 0
    %989 = vmatpush1.bf16.msra.mxu0 %v976
    %990 = vmatprep.subr.bf16.mxu0 0
    %991 = vmatpush1.bf16.msra.mxu0 %v975
    %992 = vmatprep.subr.bf16.mxu0 0
    %993 = vmatpush1.bf16.msra.mxu0 %v974
    %994 = vmatprep.subr.bf16.mxu0 0
    %995 = vmatpush1.bf16.msra.mxu0 %v973
    %996 = vmatprep.subr.bf16.mxu0 0
    %997 = vmatpush1.bf16.msra.mxu0 %v972
    %998 = vmatprep.subr.bf16.mxu0 0
    %999 = vmatpush1.bf16.msra.mxu0 %v971
    %1000 = vmatprep.subr.bf16.mxu0 0
    %1001 = vmatpush1.bf16.msra.mxu0 %v970
    %1002 = vmatprep.subr.bf16.mxu0 0
    %1003 = vmatpush2.bf16.msra.mxu0 0
    %1004 = vmatprep.subr.bf16.mxu0 0
    %1005 = vmatpush2.bf16.msra.mxu0 0
    %1006 = vmatprep.subr.bf16.mxu0 0
    %1007 = vmatpush2.bf16.msra.mxu0 0
    %1008 = vmatprep.subr.bf16.mxu0 0
    %1009 = vmatpush2.bf16.msra.mxu0 0
    %1010 = vmatprep.subr.bf16.mxu0 0
    %1011 = vmatpush2.bf16.msra.mxu0 0
    %1012 = vmatprep.subr.bf16.mxu0 0
    %1013 = vmatpush2.bf16.msra.mxu0 0
    %1014 = vmatprep.subr.bf16.mxu0 0
    %1015 = vmatpush2.bf16.msra.mxu0 0
    %1016 = vmatprep.subr.bf16.mxu0 0
    %1017 = vmatpush2.bf16.msra.mxu0 0
    %1018 = vmatprep.mubr.bf16.mxu0 0
    %1019 = vmatmul.mubr.bf16.gmra.mxu0 %v817
    %v1020 = vpop.f32.mrf.mxu0
    %v1021 = vadd.f32 %v933, %v1020
    %v1022 = vpop.f32.mrf.mxu0
    %v1023 = vpop.f32.mrf.mxu0
    %v1024 = vpop.f32.mrf.mxu0
    %1025 = vdwg.mxu0
    %v1026 = vld [vmem:[%s14] sm:$0x1]
    %v1028 = vlaneseq
    %v1029 = vshrl.u32 %v1028, 7
    %v1030 = vsub.s32 0, %v1029
    %v1031 = vrot.slane %v1026, %v1030
    %v1033 = vadd.f32 %v1021, %v1031
    %vm1034 = vcmp.gt.f32.partialorder %v1033, 0.0
    %v1035 = vmul.f32 %v1033, 1.442695
    %v1036 = vpow.pop %v1035
    %v1037 = vsub.f32 %v1036, 1.0
    %v1038 = vsel %vm1034, %v1033, %v1037
    %v1039 = vpack.c.bf16 %v1038, %v1038
    %v1040 = vld [vmem:[#allocation19] sm:$0xf]
    %v1041 = vld [vmem:[#allocation19 + $0x4] sm:$0xf]
    %v1042 = vld [vmem:[#allocation19 + $0x8] sm:$0xf]
    %v1043 = vld [vmem:[#allocation19 + $0xc] sm:$0xf]
    %v1044 = vld [vmem:[#allocation19 + $0x10] sm:$0xf]
    %v1045 = vld [vmem:[#allocation19 + $0x14] sm:$0xf]
    %v1046 = vld [vmem:[#allocation19 + $0x18] sm:$0xf]
    %v1047 = vld [vmem:[#allocation19 + $0x1c] sm:$0xf]
    %v1048 = vld [vmem:[#allocation19 + $0x20] sm:$0xf]
    %v1049 = vld [vmem:[#allocation19 + $0x24] sm:$0xf]
    %v1050 = vld [vmem:[#allocation19 + $0x28] sm:$0xf]
    %v1051 = vld [vmem:[#allocation19 + $0x2c] sm:$0xf]
    %v1052 = vld [vmem:[#allocation19 + $0x30] sm:$0xf]
    %v1053 = vld [vmem:[#allocation19 + $0x34] sm:$0xf]
    %v1054 = vld [vmem:[#allocation19 + $0x38] sm:$0xf]
    %v1055 = vld [vmem:[#allocation19 + $0x3c] sm:$0xf]
    %v1056 = vld [vmem:[%s16] sm:$0x1]
    %v1058 = vlaneseq
    %v1059 = vshrl.u32 %v1058, 7
    %v1060 = vsub.s32 0, %v1059
    %v1061 = vrot.slane %v1056, %v1060
    %v1079 = vunpack.c.l.b16 %v1040
    %v1080 = vunpack.c.l.b16 %v1041
    %v1081 = vunpack.c.l.b16 %v1042
    %v1082 = vunpack.c.l.b16 %v1043
    %v1083 = vunpack.c.l.b16 %v1044
    %v1084 = vunpack.c.l.b16 %v1045
    %v1085 = vunpack.c.l.b16 %v1046
    %v1086 = vunpack.c.l.b16 %v1047
    %v1087 = vunpack.c.l.b16 %v1048
    %v1088 = vunpack.c.l.b16 %v1049
    %v1089 = vunpack.c.l.b16 %v1050
    %v1090 = vunpack.c.l.b16 %v1051
    %v1091 = vunpack.c.l.b16 %v1052
    %v1092 = vunpack.c.l.b16 %v1053
    %v1093 = vunpack.c.l.b16 %v1054
    %v1094 = vunpack.c.l.b16 %v1055
    %v1095 = vpack.c.b16 %v1080, %v1079
    %v1096 = vpack.c.b16 %v1082, %v1081
    %v1097 = vpack.c.b16 %v1084, %v1083
    %v1098 = vpack.c.b16 %v1086, %v1085
    %v1099 = vpack.c.b16 %v1088, %v1087
    %v1100 = vpack.c.b16 %v1090, %v1089
    %v1101 = vpack.c.b16 %v1092, %v1091
    %v1102 = vpack.c.b16 %v1094, %v1093
    %1111 = vmatprep.subr.bf16.mxu0 0
    %1112 = vmatpush1.bf16.msra.mxu0 %v1102
    %1113 = vmatprep.subr.bf16.mxu0 0
    %1114 = vmatpush1.bf16.msra.mxu0 %v1101
    %1115 = vmatprep.subr.bf16.mxu0 0
    %1116 = vmatpush1.bf16.msra.mxu0 %v1100
    %1117 = vmatprep.subr.bf16.mxu0 0
    %1118 = vmatpush1.bf16.msra.mxu0 %v1099
    %1119 = vmatprep.subr.bf16.mxu0 0
    %1120 = vmatpush1.bf16.msra.mxu0 %v1098
    %1121 = vmatprep.subr.bf16.mxu0 0
    %1122 = vmatpush1.bf16.msra.mxu0 %v1097
    %1123 = vmatprep.subr.bf16.mxu0 0
    %1124 = vmatpush1.bf16.msra.mxu0 %v1096
    %1125 = vmatprep.subr.bf16.mxu0 0
    %1126 = vmatpush1.bf16.msra.mxu0 %v1095
    %1127 = vmatprep.subr.bf16.mxu0 0
    %1128 = vmatpush2.bf16.msra.mxu0 0
    %1129 = vmatprep.subr.bf16.mxu0 0
    %1130 = vmatpush2.bf16.msra.mxu0 0
    %1131 = vmatprep.subr.bf16.mxu0 0
    %1132 = vmatpush2.bf16.msra.mxu0 0
    %1133 = vmatprep.subr.bf16.mxu0 0
    %1134 = vmatpush2.bf16.msra.mxu0 0
    %1135 = vmatprep.subr.bf16.mxu0 0
    %1136 = vmatpush2.bf16.msra.mxu0 0
    %1137 = vmatprep.subr.bf16.mxu0 0
    %1138 = vmatpush2.bf16.msra.mxu0 0
    %1139 = vmatprep.subr.bf16.mxu0 0
    %1140 = vmatpush2.bf16.msra.mxu0 0
    %1141 = vmatprep.subr.bf16.mxu0 0
    %1142 = vmatpush2.bf16.msra.mxu0 0
    %1143 = vmatprep.mubr.bf16.mxu0 0
    %1144 = vmatmul.mubr.bf16.gmra.mxu0 %v1039
    %v1145 = vpop.f32.mrf.mxu0
    %v1146 = vadd.f32 %v1061, %v1145
    %v1147 = vpop.f32.mrf.mxu0
    %v1148 = vpop.f32.mrf.mxu0
    %v1149 = vpop.f32.mrf.mxu0
    %1150 = vdwg.mxu0
    %vm1151 = vcmp.gt.f32.partialorder %v1146, 0.0
    %v1152 = vmul.f32 %v1146, 1.442695
    %v1153 = vpow.pop %v1152
    %v1154 = vsub.f32 %v1153, 1.0
    %v1155 = vsel %vm1151, %v1146, %v1154
    %v1156 = vpack.c.bf16 %v1155, %v1155
    %v1157 = vld [vmem:[#allocation20] sm:$0xf]
    %v1158 = vld [vmem:[#allocation20 + $0x4] sm:$0xf]
    %v1159 = vld [vmem:[#allocation20 + $0x8] sm:$0xf]
    %v1160 = vld [vmem:[#allocation20 + $0xc] sm:$0xf]
    %v1161 = vld [vmem:[#allocation20 + $0x10] sm:$0xf]
    %v1162 = vld [vmem:[#allocation20 + $0x14] sm:$0xf]
    %v1163 = vld [vmem:[#allocation20 + $0x18] sm:$0xf]
    %v1164 = vld [vmem:[#allocation20 + $0x1c] sm:$0xf]
    %v1165 = vld [vmem:[#allocation20 + $0x20] sm:$0xf]
    %v1166 = vld [vmem:[#allocation20 + $0x24] sm:$0xf]
    %v1167 = vld [vmem:[#allocation20 + $0x28] sm:$0xf]
    %v1168 = vld [vmem:[#allocation20 + $0x2c] sm:$0xf]
    %v1169 = vld [vmem:[#allocation20 + $0x30] sm:$0xf]
    %v1170 = vld [vmem:[#allocation20 + $0x34] sm:$0xf]
    %v1171 = vld [vmem:[#allocation20 + $0x38] sm:$0xf]
    %v1172 = vld [vmem:[#allocation20 + $0x3c] sm:$0xf]
    %v1189 = vunpack.c.l.b16 %v1157
    %v1190 = vunpack.c.l.b16 %v1158
    %v1191 = vunpack.c.l.b16 %v1159
    %v1192 = vunpack.c.l.b16 %v1160
    %v1193 = vunpack.c.l.b16 %v1161
    %v1194 = vunpack.c.l.b16 %v1162
    %v1195 = vunpack.c.l.b16 %v1163
    %v1196 = vunpack.c.l.b16 %v1164
    %v1197 = vunpack.c.l.b16 %v1165
    %v1198 = vunpack.c.l.b16 %v1166
    %v1199 = vunpack.c.l.b16 %v1167
    %v1200 = vunpack.c.l.b16 %v1168
    %v1201 = vunpack.c.l.b16 %v1169
    %v1202 = vunpack.c.l.b16 %v1170
    %v1203 = vunpack.c.l.b16 %v1171
    %v1204 = vunpack.c.l.b16 %v1172
    %v1205 = vpack.c.b16 %v1190, %v1189
    %v1206 = vpack.c.b16 %v1192, %v1191
    %v1207 = vpack.c.b16 %v1194, %v1193
    %v1208 = vpack.c.b16 %v1196, %v1195
    %v1209 = vpack.c.b16 %v1198, %v1197
    %v1210 = vpack.c.b16 %v1200, %v1199
    %v1211 = vpack.c.b16 %v1202, %v1201
    %v1212 = vpack.c.b16 %v1204, %v1203
    %1221 = vmatprep.subr.bf16.mxu0 0
    %1222 = vmatpush1.bf16.msra.mxu0 %v1212
    %1223 = vmatprep.subr.bf16.mxu0 0
    %1224 = vmatpush1.bf16.msra.mxu0 %v1211
    %1225 = vmatprep.subr.bf16.mxu0 0
    %1226 = vmatpush1.bf16.msra.mxu0 %v1210
    %1227 = vmatprep.subr.bf16.mxu0 0
    %1228 = vmatpush1.bf16.msra.mxu0 %v1209
    %1229 = vmatprep.subr.bf16.mxu0 0
    %1230 = vmatpush1.bf16.msra.mxu0 %v1208
    %1231 = vmatprep.subr.bf16.mxu0 0
    %1232 = vmatpush1.bf16.msra.mxu0 %v1207
    %1233 = vmatprep.subr.bf16.mxu0 0
    %1234 = vmatpush1.bf16.msra.mxu0 %v1206
    %1235 = vmatprep.subr.bf16.mxu0 0
    %1236 = vmatpush1.bf16.msra.mxu0 %v1205
    %1237 = vmatprep.subr.bf16.mxu0 0
    %1238 = vmatpush2.bf16.msra.mxu0 0
    %1239 = vmatprep.subr.bf16.mxu0 0
    %1240 = vmatpush2.bf16.msra.mxu0 0
    %1241 = vmatprep.subr.bf16.mxu0 0
    %1242 = vmatpush2.bf16.msra.mxu0 0
    %1243 = vmatprep.subr.bf16.mxu0 0
    %1244 = vmatpush2.bf16.msra.mxu0 0
    %1245 = vmatprep.subr.bf16.mxu0 0
    %1246 = vmatpush2.bf16.msra.mxu0 0
    %1247 = vmatprep.subr.bf16.mxu0 0
    %1248 = vmatpush2.bf16.msra.mxu0 0
    %1249 = vmatprep.subr.bf16.mxu0 0
    %1250 = vmatpush2.bf16.msra.mxu0 0
    %1251 = vmatprep.subr.bf16.mxu0 0
    %1252 = vmatpush2.bf16.msra.mxu0 0
    %1253 = vmatprep.mubr.bf16.mxu0 0
    %1254 = vmatmul.mubr.bf16.gmra.mxu0 %v1156
    %v1255 = vpop.f32.mrf.mxu0
    %v1256 = vadd.f32 0.0, %v1255
    %v1257 = vpop.f32.mrf.mxu0
    %v1258 = vpop.f32.mrf.mxu0
    %v1259 = vpop.f32.mrf.mxu0
    %1260 = vdwg.mxu0
    %v1277 = vunpack.c.l.b16 %v683
    %v1278 = vunpack.c.l.b16 %v684
    %v1279 = vunpack.c.l.b16 %v685
    %v1280 = vunpack.c.l.b16 %v686
    %v1281 = vunpack.c.l.b16 %v687
    %v1282 = vunpack.c.l.b16 %v688
    %v1283 = vunpack.c.l.b16 %v689
    %v1284 = vunpack.c.l.b16 %v690
    %v1285 = vunpack.c.l.b16 %v691
    %v1286 = vunpack.c.l.b16 %v692
    %v1287 = vunpack.c.l.b16 %v693
    %v1288 = vunpack.c.l.b16 %v694
    %v1289 = vunpack.c.l.b16 %v695
    %v1290 = vunpack.c.l.b16 %v696
    %v1291 = vunpack.c.l.b16 %v697
    %v1292 = vunpack.c.l.b16 %v698
    %v1293 = vpack.c.b16 %v1278, %v1277
    %v1294 = vpack.c.b16 %v1280, %v1279
    %v1295 = vpack.c.b16 %v1282, %v1281
    %v1296 = vpack.c.b16 %v1284, %v1283
    %v1297 = vpack.c.b16 %v1286, %v1285
    %v1298 = vpack.c.b16 %v1288, %v1287
    %v1299 = vpack.c.b16 %v1290, %v1289
    %v1300 = vpack.c.b16 %v1292, %v1291
    %1309 = vmatprep.subr.bf16.mxu0 0
    %1310 = vmatpush1.bf16.msra.mxu0 %v1300
    %1311 = vmatprep.subr.bf16.mxu0 0
    %1312 = vmatpush1.bf16.msra.mxu0 %v1299
    %1313 = vmatprep.subr.bf16.mxu0 0
    %1314 = vmatpush1.bf16.msra.mxu0 %v1298
    %1315 = vmatprep.subr.bf16.mxu0 0
    %1316 = vmatpush1.bf16.msra.mxu0 %v1297
    %1317 = vmatprep.subr.bf16.mxu0 0
    %1318 = vmatpush1.bf16.msra.mxu0 %v1296
    %1319 = vmatprep.subr.bf16.mxu0 0
    %1320 = vmatpush1.bf16.msra.mxu0 %v1295
    %1321 = vmatprep.subr.bf16.mxu0 0
    %1322 = vmatpush1.bf16.msra.mxu0 %v1294
    %1323 = vmatprep.subr.bf16.mxu0 0
    %1324 = vmatpush1.bf16.msra.mxu0 %v1293
    %1325 = vmatprep.subr.bf16.mxu0 0
    %1326 = vmatpush2.bf16.msra.mxu0 0
    %1327 = vmatprep.subr.bf16.mxu0 0
    %1328 = vmatpush2.bf16.msra.mxu0 0
    %1329 = vmatprep.subr.bf16.mxu0 0
    %1330 = vmatpush2.bf16.msra.mxu0 0
    %1331 = vmatprep.subr.bf16.mxu0 0
    %1332 = vmatpush2.bf16.msra.mxu0 0
    %1333 = vmatprep.subr.bf16.mxu0 0
    %1334 = vmatpush2.bf16.msra.mxu0 0
    %1335 = vmatprep.subr.bf16.mxu0 0
    %1336 = vmatpush2.bf16.msra.mxu0 0
    %1337 = vmatprep.subr.bf16.mxu0 0
    %1338 = vmatpush2.bf16.msra.mxu0 0
    %1339 = vmatprep.subr.bf16.mxu0 0
    %1340 = vmatpush2.bf16.msra.mxu0 0
    %1341 = vmatprep.mubr.bf16.mxu0 0
    %1342 = vmatmul.mubr.bf16.gmra.mxu0 %v682
    %v1343 = vpop.f32.mrf.mxu0
    %v1344 = vadd.f32 %v1256, %v1343
    %v1345 = vpop.f32.mrf.mxu0
    %v1346 = vpop.f32.mrf.mxu0
    %v1347 = vpop.f32.mrf.mxu0
    %1348 = vdwg.mxu0
    %v1349 = vld [vmem:[%s18] sm:$0x1]
    %v1351 = vlaneseq
    %v1352 = vshrl.u32 %v1351, 7
    %v1353 = vsub.s32 0, %v1352
    %v1354 = vrot.slane %v1349, %v1353
    %v1356 = vadd.f32 %v1344, %v1354
    %1357 = vst [vmem:[#allocation22] sm:$0xff] %v1356
    // Predicated region
    $region126: #{tpu_custom_call.1} parent=1 // pred_check
      _
    $region127: #{tpu_custom_call.1} parent=1 // pred_check_branch
      %1359 = sbr.rel (0) target = $region129
    $region128: #{tpu_custom_call.1} parent=1 // pred_region
      %s1361 = ssub.s32 128, 128
      %1362 = vsyncadd [#allocation4], %s1361
      %s1364 = sshll.u32 [#allocation22], 4
      %s1365 = int_to_ptr.vmem [resolvable:$true] %s1364
      %1367 = dma.vmem_to_hbm [thread:$0]  %s1365, 128, %s19, [#allocation4]
    $region129: #{tpu_custom_call.1} parent=1 // pred_fallthru
      _
    // Predicated region
    $region130: #{tpu_custom_call.1} parent=1 // pred_check
      _
    $region131: #{tpu_custom_call.1} parent=1 // pred_check_branch
      %1369 = sbr.rel (0) target = $region133
    $region132: #{tpu_custom_call.1} parent=1 // pred_region
      %1370 = dma.done [#allocation4], 128
    $region133: #{tpu_custom_call.1} parent=1 // pred_fallthru
      _
    %1371 = vsyncpa [#allocation3], 1
    %1372 = vsyncpa [#allocation6], 1
    %1373 = vsyncpa [#allocation9], 1
    %1374 = vsyncpa [#allocation12], 1
    %1375 = vsyncpa [#allocation15], 1
    %1376 = vsyncpa [#allocation18], 1
    %1377 = vsyncpa [#allocation21], 1
    %1378 = vsyncpa [#allocation4], 1

</llo_original>
